<compile_context>
chip_gen: v7x
topology: tpu7x:2x2x1
jax: 0.10.0
libtpu: 0.0.40
codegen_flags: <defaults>
</compile_context>

<pallas_src>
import functools
import math

import numpy as np

import jax
import jax.numpy as jnp
from jax.experimental import pallas as pl
from jax.experimental.pallas import tpu as pltpu

C_IN = 5  # fixed by the module (Conv2d(5, 5, ...))


def _round_up(x, m):
    return ((x + m - 1) // m) * m


def _edge_masks(H, W, HWp):
    """(4, HWp) float32 masks for the 3x3 halo on the flattened (padded) spatial axis.

    Row 0: position has a valid row above  (reads h-1)
    Row 1: position has a valid row below  (reads h+1)
    Row 2: position has a valid col left   (reads w-1)
    Row 3: position has a valid col right  (reads w+1)
    Padded lane positions (>= H*W) are all-invalid; their outputs are sliced away.
    """
    HW = H * W
    row = np.repeat(np.arange(H), W)
    col = np.tile(np.arange(W), H)
    m = np.zeros((4, HWp), dtype=np.float32)
    m[0, :HW] = row >= 1
    m[1, :HW] = row <= H - 2
    m[2, :HW] = col >= 1
    m[3, :HW] = col <= W - 2
    return jnp.asarray(m)


def _stacker_kernel(x_ref, m_ref, w1_ref, b1_ref, kdw_ref, wf_ref, bf_ref, o_ref, *, W):
    """One (1, b_blk, ...) batch block per grid step; spatial flattened onto lanes.

    x_ref   : (1, B, 5*HWp) VMEM  input block (channel c at lanes [c*HWp, (c+1)*HWp))
    m_ref   : (4, HWp)      VMEM  edge masks (constant block index -> fetched once)
    w1_ref  : (5, 5)        SMEM  1x1 conv weight (out, in)
    b1_ref  : (5,)          SMEM  1x1 conv bias
    kdw_ref : (5, 9)        SMEM  depthwise 3x3 weights, flattened (di*3 + dj)
    wf_ref  : (5,)          SMEM  fuse 1x1 conv weight (out=1)
    bf_ref  : (1,)          SMEM  fuse bias
    o_ref   : (1, B, HWp)   VMEM  output block
    """
    _, B, HWp = o_ref.shape

    # Edge masks, broadcast once per grid step (b_blk is capped so these plus the
    # per-channel temporaries fit comfortably inside the 64-vreg file -> no spills).
    m_up = jnp.broadcast_to(m_ref[0:1, :], (B, HWp))
    m_dn = jnp.broadcast_to(m_ref[1:2, :], (B, HWp))
    m_lf = jnp.broadcast_to(m_ref[2:3, :], (B, HWp))
    m_rt = jnp.broadcast_to(m_ref[3:4, :], (B, HWp))

    out = None
    for c in range(C_IN):
        # ---- w1: 1x1 conv (5 -> 5) + bias, fused into this channel's dw use. ----
        y = w1_ref[c, 0] * x_ref[0, :, 0:HWp]
        for ci in range(1, C_IN):
            y = y + w1_ref[c, ci] * x_ref[0, :, ci * HWp:(ci + 1) * HWp]
        y = y + b1_ref[c]                                # scalar bias add

        # ---- dw: depthwise 3x3 (padding=1, groups=5).  Row taps first (2 XLU rolls +
        # row masks), combine with the per-column kernel weights, then only 2 column
        # rolls + column masks (4 rolls / channel total, VPU does the FMAs). ----
        r_up = m_up * pltpu.roll(y, W, 1)                # reads row h-1  (di = 0)
        r_dn = m_dn * pltpu.roll(y, HWp - W, 1)          # reads row h+1  (di = 2)
        t_lf = kdw_ref[c, 0] * r_up + kdw_ref[c, 3] * y + kdw_ref[c, 6] * r_dn
        t_ct = kdw_ref[c, 1] * r_up + kdw_ref[c, 4] * y + kdw_ref[c, 7] * r_dn
        t_rt = kdw_ref[c, 2] * r_up + kdw_ref[c, 5] * y + kdw_ref[c, 8] * r_dn
        acc = (m_lf * pltpu.roll(t_lf, 1, 1)             # reads col w-1  (dj = 0)
               + t_ct
               + m_rt * pltpu.roll(t_rt, HWp - 1, 1))    # reads col w+1  (dj = 2)

        # ---- ReLU -> fuse 1x1 conv (5 -> 1). ----
        fused = wf_ref[c] * jnp.maximum(acc, 0.0)
        out = fused if out is None else out + fused

    o_ref[0, :, :] = (out + bf_ref[0]).astype(o_ref.dtype)


def _pick_b_blk(N, HWp):
    """Batch elements per grid step.

    Capped by (a) a vreg live-set budget: ~11 live (b_blk, HWp) f32 tensors (4 masks +
    dw temporaries) kept under ~3/4 of the 256 KiB vreg file, and (b) a ~4 MiB per-step
    VMEM block (input+output) so the double-buffered blocks fit v5e's 16 MiB default
    scoped VMEM and v7x's 32 MiB default.  Prefers sublane-full blocks and >= 2 grid
    steps so the parallel batch axis shards across v7x's two TensorCores.
    """
    live = 11
    vreg_cap = max(1, (192 * 1024) // (live * HWp * 4))
    vmem_cap = max(1, (4 << 20) // ((C_IN + 1) * HWp * 4))
    cap = min(vreg_cap, vmem_cap)
    for cand in (32, 16, 8):                             # sublane-full blocks first
        if cand <= cap and N % cand == 0 and N // cand >= 2:
            return cand
    for cand in range(min(N // 2, cap), 0, -1):          # small N: keep >= 2 steps
        if N % cand == 0:
            return cand
    return max(1, min(N, cap))                           # N == 1


def stacker_forward(x, w1, b1, kdw, wf, bf, *, b_blk=None):
    """x: (N, 5, H, W) float32  ->  (N, 1, H, W) float32."""
    N, C, H, W = x.shape
    assert C == C_IN
    HW = H * W
    HWp = _round_up(max(HW, 128), 128)          # lane-dense, aligned channel slabs

    x3 = x.astype(jnp.float32).reshape(N, C_IN, HW)
    if HWp != HW:
        x3 = jnp.pad(x3, ((0, 0), (0, 0), (0, HWp - HW)))
    Nw = _round_up(N, 8) if N >= 16 else N      # ragged batches -> full sublane tiles
    if Nw != N:
        x3 = jnp.pad(x3, ((0, Nw - N), (0, 0), (0, 0)))

    if b_blk is None:
        b_blk = _pick_b_blk(Nw, HWp)
    assert Nw % b_blk == 0
    grid = Nw // b_blk

    x_blk = x3.reshape(grid, b_blk, C_IN * HWp)  # free reshape: row-major split
    kdw_flat = kdw.reshape(C_IN, 9)
    masks = _edge_masks(H, W, HWp)

    smem_spec = pl.BlockSpec(memory_space=pltpu.MemorySpace.SMEM)
    kernel = functools.partial(_stacker_kernel, W=W)

    out_blk = pl.pallas_call(
        kernel,
        out_shape=jax.ShapeDtypeStruct((grid, b_blk, HWp), jnp.float32),
        grid=(grid,),
        in_specs=[
            pl.BlockSpec((1, b_blk, C_IN * HWp), lambda i: (i, 0, 0)),
            pl.BlockSpec((4, HWp), lambda i: (0, 0)),  # constant block -> fetched once
            smem_spec,  # w1
            smem_spec,  # b1
            smem_spec,  # kdw (flattened)
            smem_spec,  # wf
            smem_spec,  # bf
        ],
        out_specs=pl.BlockSpec((1, b_blk, HWp), lambda i: (i, 0, 0)),
        compiler_params=pltpu.CompilerParams(dimension_semantics=("parallel",)),
    )(x_blk, masks, w1, b1, kdw_flat, wf, bf)

    return out_blk.reshape(Nw, HWp)[:N, :HW].reshape(N, 1, H, W)


def init_params(key):
    """Deterministic parameter init mirroring Stacker._initialize_weights()."""
    k1, k2 = jax.random.split(key, 2)
    # w1: Conv2d(5,5,1) xavier_uniform -> bound = sqrt(6 / (fan_in + fan_out))
    b_w1 = math.sqrt(6.0 / (C_IN + C_IN))
    w1 = jax.random.uniform(k1, (C_IN, C_IN), minval=-b_w1, maxval=b_w1, dtype=jnp.float32)
    b1 = jnp.full((C_IN,), 0.2, dtype=jnp.float32)
    # dw: depthwise 3x3, zeros except center = 1.0 (identity kernel)
    kdw = jnp.zeros((C_IN, 3, 3), dtype=jnp.float32).at[:, 1, 1].set(1.0)
    # fuse: Conv2d(5,1,1) xavier_uniform -> bound = sqrt(6 / (5 + 1)) = 1.0
    b_f = math.sqrt(6.0 / (C_IN + 1))
    wf = jax.random.uniform(k2, (C_IN,), minval=-b_f, maxval=b_f, dtype=jnp.float32)
    bf = jnp.zeros((1,), dtype=jnp.float32)
    return w1, b1, kdw, wf, bf


def reference_forward(x, w1, b1, kdw, wf, bf):
    """Pure-JAX reference (same semantics as the PyTorch forward)."""
    N, C, H, W = x.shape
    y1 = jnp.einsum("oc,nchw->nohw", w1, x) + b1[None, :, None, None]
    yp = jnp.pad(y1, ((0, 0), (0, 0), (1, 1), (1, 1)))
    y2 = jnp.zeros_like(y1)
    for di in range(3):
        for dj in range(3):
            y2 = y2 + kdw[:, di, dj][None, :, None, None] * yp[:, :, di:di + H, dj:dj + W]
    y3 = jnp.maximum(y2, 0.0)
    y4 = jnp.einsum("c,nchw->nhw", wf, y3)[:, None] + bf[0]
    return y4


if __name__ == "__main__":
    key = jax.random.PRNGKey(0)
    k_params, k_x = jax.random.split(key)
    w1, b1, kdw, wf, bf = init_params(k_params)

    # Small NCHW input: batch=2, channels=5 (fixed by the module), spatial=16x16.
    x = jax.random.normal(k_x, (2, C_IN, 16, 16), dtype=jnp.float32)

    out = stacker_forward(x, w1, b1, kdw, wf, bf)
    out = jax.block_until_ready(out)

    ref = reference_forward(x, w1, b1, kdw, wf, bf)
    assert out.shape == (2, 1, 16, 16), out.shape
    assert jnp.allclose(out, ref, atol=1e-5, rtol=1e-5), float(jnp.max(jnp.abs(out - ref)))

    print("KERNEL_OK")
</pallas_src>

<mosaic_0001>
module attributes {stable_mosaic.version = 11 : i64} {
  func.func @_stacker_kernel(%arg0: i32, %arg1: memref<1x1x1280xf32, #tpu.memory_space<vmem>>, %arg2: memref<4x256xf32, #tpu.memory_space<vmem>>, %arg3: memref<5x5xf32, #tpu.memory_space<smem>>, %arg4: memref<5xf32, #tpu.memory_space<smem>>, %arg5: memref<5x9xf32, #tpu.memory_space<smem>>, %arg6: memref<5xf32, #tpu.memory_space<smem>>, %arg7: memref<1xf32, #tpu.memory_space<smem>>, %arg8: memref<1x1x256xf32, #tpu.memory_space<vmem>>) attributes {dimension_semantics = [#tpu.dimension_semantics<parallel>], iteration_bounds = array<i64: 2>, scalar_prefetch = 0 : i64, scratch_operands = 0 : i64, tpu.core_type = #tpu.core_type<tc>, window_params = [{transform_indices = @transform_0, window_bounds = array<i64: 1, 1, 1280>}, {pipeline_mode = #tpu.pipeline_mode<synchronous>, transform_indices = @transform_1, window_bounds = array<i64: 4, 256>}, {transform_indices = @transform_2, window_bounds = array<i64: 5, 5>}, {transform_indices = @transform_3, window_bounds = array<i64: 5>}, {transform_indices = @transform_4, window_bounds = array<i64: 5, 9>}, {transform_indices = @transform_5, window_bounds = array<i64: 5>}, {transform_indices = @transform_6, window_bounds = array<i64: 1>}, {transform_indices = @transform_7, window_bounds = array<i64: 1, 1, 256>}]} {
    %c0 = arith.constant 0 : index
    %c0_0 = arith.constant 0 : index
    %0 = vector.load %arg2[%c0, %c0_0] : memref<4x256xf32, #tpu.memory_space<vmem>>, vector<1x256xf32>
    %c1 = arith.constant 1 : index
    %c0_1 = arith.constant 0 : index
    %1 = vector.load %arg2[%c1, %c0_1] : memref<4x256xf32, #tpu.memory_space<vmem>>, vector<1x256xf32>
    %c2 = arith.constant 2 : index
    %c0_2 = arith.constant 0 : index
    %2 = vector.load %arg2[%c2, %c0_2] : memref<4x256xf32, #tpu.memory_space<vmem>>, vector<1x256xf32>
    %c3 = arith.constant 3 : index
    %c0_3 = arith.constant 0 : index
    %3 = vector.load %arg2[%c3, %c0_3] : memref<4x256xf32, #tpu.memory_space<vmem>>, vector<1x256xf32>
    %c0_4 = arith.constant 0 : index
    %c0_5 = arith.constant 0 : index
    %4 = memref.load %arg3[%c0_4, %c0_5] : memref<5x5xf32, #tpu.memory_space<smem>>
    %c0_6 = arith.constant 0 : index
    %c0_7 = arith.constant 0 : index
    %c0_8 = arith.constant 0 : index
    %5 = vector.load %arg1[%c0_6, %c0_7, %c0_8] : memref<1x1x1280xf32, #tpu.memory_space<vmem>>, vector<1x1x256xf32>
    %6 = vector.shape_cast %5 : vector<1x1x256xf32> to vector<1x256xf32>
    %7 = vector.broadcast %4 : f32 to vector<1x256xf32>
    %8 = arith.mulf %7, %6 : vector<1x256xf32>
    %c0_9 = arith.constant 0 : index
    %c1_10 = arith.constant 1 : index
    %9 = memref.load %arg3[%c0_9, %c1_10] : memref<5x5xf32, #tpu.memory_space<smem>>
    %c0_11 = arith.constant 0 : index
    %c0_12 = arith.constant 0 : index
    %c256 = arith.constant 256 : index
    %10 = vector.load %arg1[%c0_11, %c0_12, %c256] : memref<1x1x1280xf32, #tpu.memory_space<vmem>>, vector<1x1x256xf32>
    %11 = vector.shape_cast %10 : vector<1x1x256xf32> to vector<1x256xf32>
    %12 = vector.broadcast %9 : f32 to vector<1x256xf32>
    %13 = arith.mulf %12, %11 : vector<1x256xf32>
    %14 = arith.addf %8, %13 : vector<1x256xf32>
    %c0_13 = arith.constant 0 : index
    %c2_14 = arith.constant 2 : index
    %15 = memref.load %arg3[%c0_13, %c2_14] : memref<5x5xf32, #tpu.memory_space<smem>>
    %c0_15 = arith.constant 0 : index
    %c0_16 = arith.constant 0 : index
    %c512 = arith.constant 512 : index
    %16 = vector.load %arg1[%c0_15, %c0_16, %c512] : memref<1x1x1280xf32, #tpu.memory_space<vmem>>, vector<1x1x256xf32>
    %17 = vector.shape_cast %16 : vector<1x1x256xf32> to vector<1x256xf32>
    %18 = vector.broadcast %15 : f32 to vector<1x256xf32>
    %19 = arith.mulf %18, %17 : vector<1x256xf32>
    %20 = arith.addf %14, %19 : vector<1x256xf32>
    %c0_17 = arith.constant 0 : index
    %c3_18 = arith.constant 3 : index
    %21 = memref.load %arg3[%c0_17, %c3_18] : memref<5x5xf32, #tpu.memory_space<smem>>
    %c0_19 = arith.constant 0 : index
    %c0_20 = arith.constant 0 : index
    %c768 = arith.constant 768 : index
    %22 = vector.load %arg1[%c0_19, %c0_20, %c768] : memref<1x1x1280xf32, #tpu.memory_space<vmem>>, vector<1x1x256xf32>
    %23 = vector.shape_cast %22 : vector<1x1x256xf32> to vector<1x256xf32>
    %24 = vector.broadcast %21 : f32 to vector<1x256xf32>
    %25 = arith.mulf %24, %23 : vector<1x256xf32>
    %26 = arith.addf %20, %25 : vector<1x256xf32>
    %c0_21 = arith.constant 0 : index
    %c4 = arith.constant 4 : index
    %27 = memref.load %arg3[%c0_21, %c4] : memref<5x5xf32, #tpu.memory_space<smem>>
    %c0_22 = arith.constant 0 : index
    %c0_23 = arith.constant 0 : index
    %c1024 = arith.constant 1024 : index
    %28 = vector.load %arg1[%c0_22, %c0_23, %c1024] : memref<1x1x1280xf32, #tpu.memory_space<vmem>>, vector<1x1x256xf32>
    %29 = vector.shape_cast %28 : vector<1x1x256xf32> to vector<1x256xf32>
    %30 = vector.broadcast %27 : f32 to vector<1x256xf32>
    %31 = arith.mulf %30, %29 : vector<1x256xf32>
    %32 = arith.addf %26, %31 : vector<1x256xf32>
    %c0_24 = arith.constant 0 : index
    %33 = memref.load %arg4[%c0_24] : memref<5xf32, #tpu.memory_space<smem>>
    %34 = vector.broadcast %33 : f32 to vector<1x256xf32>
    %35 = arith.addf %32, %34 : vector<1x256xf32>
    %c16_i32 = arith.constant 16 : i32
    %36 = tpu.dynamic_rotate %35 by %c16_i32 dim 1 : vector<1x256xf32>, i32 -> vector<1x256xf32>
    %37 = arith.mulf %0, %36 : vector<1x256xf32>
    %c240_i32 = arith.constant 240 : i32
    %38 = tpu.dynamic_rotate %35 by %c240_i32 dim 1 : vector<1x256xf32>, i32 -> vector<1x256xf32>
    %39 = arith.mulf %1, %38 : vector<1x256xf32>
    %c0_25 = arith.constant 0 : index
    %c0_26 = arith.constant 0 : index
    %40 = memref.load %arg5[%c0_25, %c0_26] : memref<5x9xf32, #tpu.memory_space<smem>>
    %41 = vector.broadcast %40 : f32 to vector<1x256xf32>
    %42 = arith.mulf %41, %37 : vector<1x256xf32>
    %c0_27 = arith.constant 0 : index
    %c3_28 = arith.constant 3 : index
    %43 = memref.load %arg5[%c0_27, %c3_28] : memref<5x9xf32, #tpu.memory_space<smem>>
    %44 = vector.broadcast %43 : f32 to vector<1x256xf32>
    %45 = arith.mulf %44, %35 : vector<1x256xf32>
    %46 = arith.addf %42, %45 : vector<1x256xf32>
    %c0_29 = arith.constant 0 : index
    %c6 = arith.constant 6 : index
    %47 = memref.load %arg5[%c0_29, %c6] : memref<5x9xf32, #tpu.memory_space<smem>>
    %48 = vector.broadcast %47 : f32 to vector<1x256xf32>
    %49 = arith.mulf %48, %39 : vector<1x256xf32>
    %50 = arith.addf %46, %49 : vector<1x256xf32>
    %c0_30 = arith.constant 0 : index
    %c1_31 = arith.constant 1 : index
    %51 = memref.load %arg5[%c0_30, %c1_31] : memref<5x9xf32, #tpu.memory_space<smem>>
    %52 = vector.broadcast %51 : f32 to vector<1x256xf32>
    %53 = arith.mulf %52, %37 : vector<1x256xf32>
    %c0_32 = arith.constant 0 : index
    %c4_33 = arith.constant 4 : index
    %54 = memref.load %arg5[%c0_32, %c4_33] : memref<5x9xf32, #tpu.memory_space<smem>>
    %55 = vector.broadcast %54 : f32 to vector<1x256xf32>
    %56 = arith.mulf %55, %35 : vector<1x256xf32>
    %57 = arith.addf %53, %56 : vector<1x256xf32>
    %c0_34 = arith.constant 0 : index
    %c7 = arith.constant 7 : index
    %58 = memref.load %arg5[%c0_34, %c7] : memref<5x9xf32, #tpu.memory_space<smem>>
    %59 = vector.broadcast %58 : f32 to vector<1x256xf32>
    %60 = arith.mulf %59, %39 : vector<1x256xf32>
    %61 = arith.addf %57, %60 : vector<1x256xf32>
    %c0_35 = arith.constant 0 : index
    %c2_36 = arith.constant 2 : index
    %62 = memref.load %arg5[%c0_35, %c2_36] : memref<5x9xf32, #tpu.memory_space<smem>>
    %63 = vector.broadcast %62 : f32 to vector<1x256xf32>
    %64 = arith.mulf %63, %37 : vector<1x256xf32>
    %c0_37 = arith.constant 0 : index
    %c5 = arith.constant 5 : index
    %65 = memref.load %arg5[%c0_37, %c5] : memref<5x9xf32, #tpu.memory_space<smem>>
    %66 = vector.broadcast %65 : f32 to vector<1x256xf32>
    %67 = arith.mulf %66, %35 : vector<1x256xf32>
    %68 = arith.addf %64, %67 : vector<1x256xf32>
    %c0_38 = arith.constant 0 : index
    %c8 = arith.constant 8 : index
    %69 = memref.load %arg5[%c0_38, %c8] : memref<5x9xf32, #tpu.memory_space<smem>>
    %70 = vector.broadcast %69 : f32 to vector<1x256xf32>
    %71 = arith.mulf %70, %39 : vector<1x256xf32>
    %72 = arith.addf %68, %71 : vector<1x256xf32>
    %c1_i32 = arith.constant 1 : i32
    %73 = tpu.dynamic_rotate %50 by %c1_i32 dim 1 : vector<1x256xf32>, i32 -> vector<1x256xf32>
    %74 = arith.mulf %2, %73 : vector<1x256xf32>
    %75 = arith.addf %74, %61 : vector<1x256xf32>
    %c255_i32 = arith.constant 255 : i32
    %76 = tpu.dynamic_rotate %72 by %c255_i32 dim 1 : vector<1x256xf32>, i32 -> vector<1x256xf32>
    %77 = arith.mulf %3, %76 : vector<1x256xf32>
    %78 = arith.addf %75, %77 : vector<1x256xf32>
    %c0_39 = arith.constant 0 : index
    %79 = memref.load %arg6[%c0_39] : memref<5xf32, #tpu.memory_space<smem>>
    %cst = arith.constant 0.000000e+00 : f32
    %80 = vector.broadcast %cst : f32 to vector<1x256xf32>
    %81 = arith.maximumf %78, %80 : vector<1x256xf32>
    %82 = vector.broadcast %79 : f32 to vector<1x256xf32>
    %83 = arith.mulf %82, %81 : vector<1x256xf32>
    %c1_40 = arith.constant 1 : index
    %c0_41 = arith.constant 0 : index
    %84 = memref.load %arg3[%c1_40, %c0_41] : memref<5x5xf32, #tpu.memory_space<smem>>
    %c0_42 = arith.constant 0 : index
    %c0_43 = arith.constant 0 : index
    %c0_44 = arith.constant 0 : index
    %85 = vector.load %arg1[%c0_42, %c0_43, %c0_44] : memref<1x1x1280xf32, #tpu.memory_space<vmem>>, vector<1x1x256xf32>
    %86 = vector.shape_cast %85 : vector<1x1x256xf32> to vector<1x256xf32>
    %87 = vector.broadcast %84 : f32 to vector<1x256xf32>
    %88 = arith.mulf %87, %86 : vector<1x256xf32>
    %c1_45 = arith.constant 1 : index
    %c1_46 = arith.constant 1 : index
    %89 = memref.load %arg3[%c1_45, %c1_46] : memref<5x5xf32, #tpu.memory_space<smem>>
    %c0_47 = arith.constant 0 : index
    %c0_48 = arith.constant 0 : index
    %c256_49 = arith.constant 256 : index
    %90 = vector.load %arg1[%c0_47, %c0_48, %c256_49] : memref<1x1x1280xf32, #tpu.memory_space<vmem>>, vector<1x1x256xf32>
    %91 = vector.shape_cast %90 : vector<1x1x256xf32> to vector<1x256xf32>
    %92 = vector.broadcast %89 : f32 to vector<1x256xf32>
    %93 = arith.mulf %92, %91 : vector<1x256xf32>
    %94 = arith.addf %88, %93 : vector<1x256xf32>
    %c1_50 = arith.constant 1 : index
    %c2_51 = arith.constant 2 : index
    %95 = memref.load %arg3[%c1_50, %c2_51] : memref<5x5xf32, #tpu.memory_space<smem>>
    %c0_52 = arith.constant 0 : index
    %c0_53 = arith.constant 0 : index
    %c512_54 = arith.constant 512 : index
    %96 = vector.load %arg1[%c0_52, %c0_53, %c512_54] : memref<1x1x1280xf32, #tpu.memory_space<vmem>>, vector<1x1x256xf32>
    %97 = vector.shape_cast %96 : vector<1x1x256xf32> to vector<1x256xf32>
    %98 = vector.broadcast %95 : f32 to vector<1x256xf32>
    %99 = arith.mulf %98, %97 : vector<1x256xf32>
    %100 = arith.addf %94, %99 : vector<1x256xf32>
    %c1_55 = arith.constant 1 : index
    %c3_56 = arith.constant 3 : index
    %101 = memref.load %arg3[%c1_55, %c3_56] : memref<5x5xf32, #tpu.memory_space<smem>>
    %c0_57 = arith.constant 0 : index
    %c0_58 = arith.constant 0 : index
    %c768_59 = arith.constant 768 : index
    %102 = vector.load %arg1[%c0_57, %c0_58, %c768_59] : memref<1x1x1280xf32, #tpu.memory_space<vmem>>, vector<1x1x256xf32>
    %103 = vector.shape_cast %102 : vector<1x1x256xf32> to vector<1x256xf32>
    %104 = vector.broadcast %101 : f32 to vector<1x256xf32>
    %105 = arith.mulf %104, %103 : vector<1x256xf32>
    %106 = arith.addf %100, %105 : vector<1x256xf32>
    %c1_60 = arith.constant 1 : index
    %c4_61 = arith.constant 4 : index
    %107 = memref.load %arg3[%c1_60, %c4_61] : memref<5x5xf32, #tpu.memory_space<smem>>
    %c0_62 = arith.constant 0 : index
    %c0_63 = arith.constant 0 : index
    %c1024_64 = arith.constant 1024 : index
    %108 = vector.load %arg1[%c0_62, %c0_63, %c1024_64] : memref<1x1x1280xf32, #tpu.memory_space<vmem>>, vector<1x1x256xf32>
    %109 = vector.shape_cast %108 : vector<1x1x256xf32> to vector<1x256xf32>
    %110 = vector.broadcast %107 : f32 to vector<1x256xf32>
    %111 = arith.mulf %110, %109 : vector<1x256xf32>
    %112 = arith.addf %106, %111 : vector<1x256xf32>
    %c1_65 = arith.constant 1 : index
    %113 = memref.load %arg4[%c1_65] : memref<5xf32, #tpu.memory_space<smem>>
    %114 = vector.broadcast %113 : f32 to vector<1x256xf32>
    %115 = arith.addf %112, %114 : vector<1x256xf32>
    %c16_i32_66 = arith.constant 16 : i32
    %116 = tpu.dynamic_rotate %115 by %c16_i32_66 dim 1 : vector<1x256xf32>, i32 -> vector<1x256xf32>
    %117 = arith.mulf %0, %116 : vector<1x256xf32>
    %c240_i32_67 = arith.constant 240 : i32
    %118 = tpu.dynamic_rotate %115 by %c240_i32_67 dim 1 : vector<1x256xf32>, i32 -> vector<1x256xf32>
    %119 = arith.mulf %1, %118 : vector<1x256xf32>
    %c1_68 = arith.constant 1 : index
    %c0_69 = arith.constant 0 : index
    %120 = memref.load %arg5[%c1_68, %c0_69] : memref<5x9xf32, #tpu.memory_space<smem>>
    %121 = vector.broadcast %120 : f32 to vector<1x256xf32>
    %122 = arith.mulf %121, %117 : vector<1x256xf32>
    %c1_70 = arith.constant 1 : index
    %c3_71 = arith.constant 3 : index
    %123 = memref.load %arg5[%c1_70, %c3_71] : memref<5x9xf32, #tpu.memory_space<smem>>
    %124 = vector.broadcast %123 : f32 to vector<1x256xf32>
    %125 = arith.mulf %124, %115 : vector<1x256xf32>
    %126 = arith.addf %122, %125 : vector<1x256xf32>
    %c1_72 = arith.constant 1 : index
    %c6_73 = arith.constant 6 : index
    %127 = memref.load %arg5[%c1_72, %c6_73] : memref<5x9xf32, #tpu.memory_space<smem>>
    %128 = vector.broadcast %127 : f32 to vector<1x256xf32>
    %129 = arith.mulf %128, %119 : vector<1x256xf32>
    %130 = arith.addf %126, %129 : vector<1x256xf32>
    %c1_74 = arith.constant 1 : index
    %c1_75 = arith.constant 1 : index
    %131 = memref.load %arg5[%c1_74, %c1_75] : memref<5x9xf32, #tpu.memory_space<smem>>
    %132 = vector.broadcast %131 : f32 to vector<1x256xf32>
    %133 = arith.mulf %132, %117 : vector<1x256xf32>
    %c1_76 = arith.constant 1 : index
    %c4_77 = arith.constant 4 : index
    %134 = memref.load %arg5[%c1_76, %c4_77] : memref<5x9xf32, #tpu.memory_space<smem>>
    %135 = vector.broadcast %134 : f32 to vector<1x256xf32>
    %136 = arith.mulf %135, %115 : vector<1x256xf32>
    %137 = arith.addf %133, %136 : vector<1x256xf32>
    %c1_78 = arith.constant 1 : index
    %c7_79 = arith.constant 7 : index
    %138 = memref.load %arg5[%c1_78, %c7_79] : memref<5x9xf32, #tpu.memory_space<smem>>
    %139 = vector.broadcast %138 : f32 to vector<1x256xf32>
    %140 = arith.mulf %139, %119 : vector<1x256xf32>
    %141 = arith.addf %137, %140 : vector<1x256xf32>
    %c1_80 = arith.constant 1 : index
    %c2_81 = arith.constant 2 : index
    %142 = memref.load %arg5[%c1_80, %c2_81] : memref<5x9xf32, #tpu.memory_space<smem>>
    %143 = vector.broadcast %142 : f32 to vector<1x256xf32>
    %144 = arith.mulf %143, %117 : vector<1x256xf32>
    %c1_82 = arith.constant 1 : index
    %c5_83 = arith.constant 5 : index
    %145 = memref.load %arg5[%c1_82, %c5_83] : memref<5x9xf32, #tpu.memory_space<smem>>
    %146 = vector.broadcast %145 : f32 to vector<1x256xf32>
    %147 = arith.mulf %146, %115 : vector<1x256xf32>
    %148 = arith.addf %144, %147 : vector<1x256xf32>
    %c1_84 = arith.constant 1 : index
    %c8_85 = arith.constant 8 : index
    %149 = memref.load %arg5[%c1_84, %c8_85] : memref<5x9xf32, #tpu.memory_space<smem>>
    %150 = vector.broadcast %149 : f32 to vector<1x256xf32>
    %151 = arith.mulf %150, %119 : vector<1x256xf32>
    %152 = arith.addf %148, %151 : vector<1x256xf32>
    %c1_i32_86 = arith.constant 1 : i32
    %153 = tpu.dynamic_rotate %130 by %c1_i32_86 dim 1 : vector<1x256xf32>, i32 -> vector<1x256xf32>
    %154 = arith.mulf %2, %153 : vector<1x256xf32>
    %155 = arith.addf %154, %141 : vector<1x256xf32>
    %c255_i32_87 = arith.constant 255 : i32
    %156 = tpu.dynamic_rotate %152 by %c255_i32_87 dim 1 : vector<1x256xf32>, i32 -> vector<1x256xf32>
    %157 = arith.mulf %3, %156 : vector<1x256xf32>
    %158 = arith.addf %155, %157 : vector<1x256xf32>
    %c1_88 = arith.constant 1 : index
    %159 = memref.load %arg6[%c1_88] : memref<5xf32, #tpu.memory_space<smem>>
    %cst_89 = arith.constant 0.000000e+00 : f32
    %160 = vector.broadcast %cst_89 : f32 to vector<1x256xf32>
    %161 = arith.maximumf %158, %160 : vector<1x256xf32>
    %162 = vector.broadcast %159 : f32 to vector<1x256xf32>
    %163 = arith.mulf %162, %161 : vector<1x256xf32>
    %164 = arith.addf %83, %163 : vector<1x256xf32>
    %c2_90 = arith.constant 2 : index
    %c0_91 = arith.constant 0 : index
    %165 = memref.load %arg3[%c2_90, %c0_91] : memref<5x5xf32, #tpu.memory_space<smem>>
    %c0_92 = arith.constant 0 : index
    %c0_93 = arith.constant 0 : index
    %c0_94 = arith.constant 0 : index
    %166 = vector.load %arg1[%c0_92, %c0_93, %c0_94] : memref<1x1x1280xf32, #tpu.memory_space<vmem>>, vector<1x1x256xf32>
    %167 = vector.shape_cast %166 : vector<1x1x256xf32> to vector<1x256xf32>
    %168 = vector.broadcast %165 : f32 to vector<1x256xf32>
    %169 = arith.mulf %168, %167 : vector<1x256xf32>
    %c2_95 = arith.constant 2 : index
    %c1_96 = arith.constant 1 : index
    %170 = memref.load %arg3[%c2_95, %c1_96] : memref<5x5xf32, #tpu.memory_space<smem>>
    %c0_97 = arith.constant 0 : index
    %c0_98 = arith.constant 0 : index
    %c256_99 = arith.constant 256 : index
    %171 = vector.load %arg1[%c0_97, %c0_98, %c256_99] : memref<1x1x1280xf32, #tpu.memory_space<vmem>>, vector<1x1x256xf32>
    %172 = vector.shape_cast %171 : vector<1x1x256xf32> to vector<1x256xf32>
    %173 = vector.broadcast %170 : f32 to vector<1x256xf32>
    %174 = arith.mulf %173, %172 : vector<1x256xf32>
    %175 = arith.addf %169, %174 : vector<1x256xf32>
    %c2_100 = arith.constant 2 : index
    %c2_101 = arith.constant 2 : index
    %176 = memref.load %arg3[%c2_100, %c2_101] : memref<5x5xf32, #tpu.memory_space<smem>>
    %c0_102 = arith.constant 0 : index
    %c0_103 = arith.constant 0 : index
    %c512_104 = arith.constant 512 : index
    %177 = vector.load %arg1[%c0_102, %c0_103, %c512_104] : memref<1x1x1280xf32, #tpu.memory_space<vmem>>, vector<1x1x256xf32>
    %178 = vector.shape_cast %177 : vector<1x1x256xf32> to vector<1x256xf32>
    %179 = vector.broadcast %176 : f32 to vector<1x256xf32>
    %180 = arith.mulf %179, %178 : vector<1x256xf32>
    %181 = arith.addf %175, %180 : vector<1x256xf32>
    %c2_105 = arith.constant 2 : index
    %c3_106 = arith.constant 3 : index
    %182 = memref.load %arg3[%c2_105, %c3_106] : memref<5x5xf32, #tpu.memory_space<smem>>
    %c0_107 = arith.constant 0 : index
    %c0_108 = arith.constant 0 : index
    %c768_109 = arith.constant 768 : index
    %183 = vector.load %arg1[%c0_107, %c0_108, %c768_109] : memref<1x1x1280xf32, #tpu.memory_space<vmem>>, vector<1x1x256xf32>
    %184 = vector.shape_cast %183 : vector<1x1x256xf32> to vector<1x256xf32>
    %185 = vector.broadcast %182 : f32 to vector<1x256xf32>
    %186 = arith.mulf %185, %184 : vector<1x256xf32>
    %187 = arith.addf %181, %186 : vector<1x256xf32>
    %c2_110 = arith.constant 2 : index
    %c4_111 = arith.constant 4 : index
    %188 = memref.load %arg3[%c2_110, %c4_111] : memref<5x5xf32, #tpu.memory_space<smem>>
    %c0_112 = arith.constant 0 : index
    %c0_113 = arith.constant 0 : index
    %c1024_114 = arith.constant 1024 : index
    %189 = vector.load %arg1[%c0_112, %c0_113, %c1024_114] : memref<1x1x1280xf32, #tpu.memory_space<vmem>>, vector<1x1x256xf32>
    %190 = vector.shape_cast %189 : vector<1x1x256xf32> to vector<1x256xf32>
    %191 = vector.broadcast %188 : f32 to vector<1x256xf32>
    %192 = arith.mulf %191, %190 : vector<1x256xf32>
    %193 = arith.addf %187, %192 : vector<1x256xf32>
    %c2_115 = arith.constant 2 : index
    %194 = memref.load %arg4[%c2_115] : memref<5xf32, #tpu.memory_space<smem>>
    %195 = vector.broadcast %194 : f32 to vector<1x256xf32>
    %196 = arith.addf %193, %195 : vector<1x256xf32>
    %c16_i32_116 = arith.constant 16 : i32
    %197 = tpu.dynamic_rotate %196 by %c16_i32_116 dim 1 : vector<1x256xf32>, i32 -> vector<1x256xf32>
    %198 = arith.mulf %0, %197 : vector<1x256xf32>
    %c240_i32_117 = arith.constant 240 : i32
    %199 = tpu.dynamic_rotate %196 by %c240_i32_117 dim 1 : vector<1x256xf32>, i32 -> vector<1x256xf32>
    %200 = arith.mulf %1, %199 : vector<1x256xf32>
    %c2_118 = arith.constant 2 : index
    %c0_119 = arith.constant 0 : index
    %201 = memref.load %arg5[%c2_118, %c0_119] : memref<5x9xf32, #tpu.memory_space<smem>>
    %202 = vector.broadcast %201 : f32 to vector<1x256xf32>
    %203 = arith.mulf %202, %198 : vector<1x256xf32>
    %c2_120 = arith.constant 2 : index
    %c3_121 = arith.constant 3 : index
    %204 = memref.load %arg5[%c2_120, %c3_121] : memref<5x9xf32, #tpu.memory_space<smem>>
    %205 = vector.broadcast %204 : f32 to vector<1x256xf32>
    %206 = arith.mulf %205, %196 : vector<1x256xf32>
    %207 = arith.addf %203, %206 : vector<1x256xf32>
    %c2_122 = arith.constant 2 : index
    %c6_123 = arith.constant 6 : index
    %208 = memref.load %arg5[%c2_122, %c6_123] : memref<5x9xf32, #tpu.memory_space<smem>>
    %209 = vector.broadcast %208 : f32 to vector<1x256xf32>
    %210 = arith.mulf %209, %200 : vector<1x256xf32>
    %211 = arith.addf %207, %210 : vector<1x256xf32>
    %c2_124 = arith.constant 2 : index
    %c1_125 = arith.constant 1 : index
    %212 = memref.load %arg5[%c2_124, %c1_125] : memref<5x9xf32, #tpu.memory_space<smem>>
    %213 = vector.broadcast %212 : f32 to vector<1x256xf32>
    %214 = arith.mulf %213, %198 : vector<1x256xf32>
    %c2_126 = arith.constant 2 : index
    %c4_127 = arith.constant 4 : index
    %215 = memref.load %arg5[%c2_126, %c4_127] : memref<5x9xf32, #tpu.memory_space<smem>>
    %216 = vector.broadcast %215 : f32 to vector<1x256xf32>
    %217 = arith.mulf %216, %196 : vector<1x256xf32>
    %218 = arith.addf %214, %217 : vector<1x256xf32>
    %c2_128 = arith.constant 2 : index
    %c7_129 = arith.constant 7 : index
    %219 = memref.load %arg5[%c2_128, %c7_129] : memref<5x9xf32, #tpu.memory_space<smem>>
    %220 = vector.broadcast %219 : f32 to vector<1x256xf32>
    %221 = arith.mulf %220, %200 : vector<1x256xf32>
    %222 = arith.addf %218, %221 : vector<1x256xf32>
    %c2_130 = arith.constant 2 : index
    %c2_131 = arith.constant 2 : index
    %223 = memref.load %arg5[%c2_130, %c2_131] : memref<5x9xf32, #tpu.memory_space<smem>>
    %224 = vector.broadcast %223 : f32 to vector<1x256xf32>
    %225 = arith.mulf %224, %198 : vector<1x256xf32>
    %c2_132 = arith.constant 2 : index
    %c5_133 = arith.constant 5 : index
    %226 = memref.load %arg5[%c2_132, %c5_133] : memref<5x9xf32, #tpu.memory_space<smem>>
    %227 = vector.broadcast %226 : f32 to vector<1x256xf32>
    %228 = arith.mulf %227, %196 : vector<1x256xf32>
    %229 = arith.addf %225, %228 : vector<1x256xf32>
    %c2_134 = arith.constant 2 : index
    %c8_135 = arith.constant 8 : index
    %230 = memref.load %arg5[%c2_134, %c8_135] : memref<5x9xf32, #tpu.memory_space<smem>>
    %231 = vector.broadcast %230 : f32 to vector<1x256xf32>
    %232 = arith.mulf %231, %200 : vector<1x256xf32>
    %233 = arith.addf %229, %232 : vector<1x256xf32>
    %c1_i32_136 = arith.constant 1 : i32
    %234 = tpu.dynamic_rotate %211 by %c1_i32_136 dim 1 : vector<1x256xf32>, i32 -> vector<1x256xf32>
    %235 = arith.mulf %2, %234 : vector<1x256xf32>
    %236 = arith.addf %235, %222 : vector<1x256xf32>
    %c255_i32_137 = arith.constant 255 : i32
    %237 = tpu.dynamic_rotate %233 by %c255_i32_137 dim 1 : vector<1x256xf32>, i32 -> vector<1x256xf32>
    %238 = arith.mulf %3, %237 : vector<1x256xf32>
    %239 = arith.addf %236, %238 : vector<1x256xf32>
    %c2_138 = arith.constant 2 : index
    %240 = memref.load %arg6[%c2_138] : memref<5xf32, #tpu.memory_space<smem>>
    %cst_139 = arith.constant 0.000000e+00 : f32
    %241 = vector.broadcast %cst_139 : f32 to vector<1x256xf32>
    %242 = arith.maximumf %239, %241 : vector<1x256xf32>
    %243 = vector.broadcast %240 : f32 to vector<1x256xf32>
    %244 = arith.mulf %243, %242 : vector<1x256xf32>
    %245 = arith.addf %164, %244 : vector<1x256xf32>
    %c3_140 = arith.constant 3 : index
    %c0_141 = arith.constant 0 : index
    %246 = memref.load %arg3[%c3_140, %c0_141] : memref<5x5xf32, #tpu.memory_space<smem>>
    %c0_142 = arith.constant 0 : index
    %c0_143 = arith.constant 0 : index
    %c0_144 = arith.constant 0 : index
    %247 = vector.load %arg1[%c0_142, %c0_143, %c0_144] : memref<1x1x1280xf32, #tpu.memory_space<vmem>>, vector<1x1x256xf32>
    %248 = vector.shape_cast %247 : vector<1x1x256xf32> to vector<1x256xf32>
    %249 = vector.broadcast %246 : f32 to vector<1x256xf32>
    %250 = arith.mulf %249, %248 : vector<1x256xf32>
    %c3_145 = arith.constant 3 : index
    %c1_146 = arith.constant 1 : index
    %251 = memref.load %arg3[%c3_145, %c1_146] : memref<5x5xf32, #tpu.memory_space<smem>>
    %c0_147 = arith.constant 0 : index
    %c0_148 = arith.constant 0 : index
    %c256_149 = arith.constant 256 : index
    %252 = vector.load %arg1[%c0_147, %c0_148, %c256_149] : memref<1x1x1280xf32, #tpu.memory_space<vmem>>, vector<1x1x256xf32>
    %253 = vector.shape_cast %252 : vector<1x1x256xf32> to vector<1x256xf32>
    %254 = vector.broadcast %251 : f32 to vector<1x256xf32>
    %255 = arith.mulf %254, %253 : vector<1x256xf32>
    %256 = arith.addf %250, %255 : vector<1x256xf32>
    %c3_150 = arith.constant 3 : index
    %c2_151 = arith.constant 2 : index
    %257 = memref.load %arg3[%c3_150, %c2_151] : memref<5x5xf32, #tpu.memory_space<smem>>
    %c0_152 = arith.constant 0 : index
    %c0_153 = arith.constant 0 : index
    %c512_154 = arith.constant 512 : index
    %258 = vector.load %arg1[%c0_152, %c0_153, %c512_154] : memref<1x1x1280xf32, #tpu.memory_space<vmem>>, vector<1x1x256xf32>
    %259 = vector.shape_cast %258 : vector<1x1x256xf32> to vector<1x256xf32>
    %260 = vector.broadcast %257 : f32 to vector<1x256xf32>
    %261 = arith.mulf %260, %259 : vector<1x256xf32>
    %262 = arith.addf %256, %261 : vector<1x256xf32>
    %c3_155 = arith.constant 3 : index
    %c3_156 = arith.constant 3 : index
    %263 = memref.load %arg3[%c3_155, %c3_156] : memref<5x5xf32, #tpu.memory_space<smem>>
    %c0_157 = arith.constant 0 : index
    %c0_158 = arith.constant 0 : index
    %c768_159 = arith.constant 768 : index
    %264 = vector.load %arg1[%c0_157, %c0_158, %c768_159] : memref<1x1x1280xf32, #tpu.memory_space<vmem>>, vector<1x1x256xf32>
    %265 = vector.shape_cast %264 : vector<1x1x256xf32> to vector<1x256xf32>
    %266 = vector.broadcast %263 : f32 to vector<1x256xf32>
    %267 = arith.mulf %266, %265 : vector<1x256xf32>
    %268 = arith.addf %262, %267 : vector<1x256xf32>
    %c3_160 = arith.constant 3 : index
    %c4_161 = arith.constant 4 : index
    %269 = memref.load %arg3[%c3_160, %c4_161] : memref<5x5xf32, #tpu.memory_space<smem>>
    %c0_162 = arith.constant 0 : index
    %c0_163 = arith.constant 0 : index
    %c1024_164 = arith.constant 1024 : index
    %270 = vector.load %arg1[%c0_162, %c0_163, %c1024_164] : memref<1x1x1280xf32, #tpu.memory_space<vmem>>, vector<1x1x256xf32>
    %271 = vector.shape_cast %270 : vector<1x1x256xf32> to vector<1x256xf32>
    %272 = vector.broadcast %269 : f32 to vector<1x256xf32>
    %273 = arith.mulf %272, %271 : vector<1x256xf32>
    %274 = arith.addf %268, %273 : vector<1x256xf32>
    %c3_165 = arith.constant 3 : index
    %275 = memref.load %arg4[%c3_165] : memref<5xf32, #tpu.memory_space<smem>>
    %276 = vector.broadcast %275 : f32 to vector<1x256xf32>
    %277 = arith.addf %274, %276 : vector<1x256xf32>
    %c16_i32_166 = arith.constant 16 : i32
    %278 = tpu.dynamic_rotate %277 by %c16_i32_166 dim 1 : vector<1x256xf32>, i32 -> vector<1x256xf32>
    %279 = arith.mulf %0, %278 : vector<1x256xf32>
    %c240_i32_167 = arith.constant 240 : i32
    %280 = tpu.dynamic_rotate %277 by %c240_i32_167 dim 1 : vector<1x256xf32>, i32 -> vector<1x256xf32>
    %281 = arith.mulf %1, %280 : vector<1x256xf32>
    %c3_168 = arith.constant 3 : index
    %c0_169 = arith.constant 0 : index
    %282 = memref.load %arg5[%c3_168, %c0_169] : memref<5x9xf32, #tpu.memory_space<smem>>
    %283 = vector.broadcast %282 : f32 to vector<1x256xf32>
    %284 = arith.mulf %283, %279 : vector<1x256xf32>
    %c3_170 = arith.constant 3 : index
    %c3_171 = arith.constant 3 : index
    %285 = memref.load %arg5[%c3_170, %c3_171] : memref<5x9xf32, #tpu.memory_space<smem>>
    %286 = vector.broadcast %285 : f32 to vector<1x256xf32>
    %287 = arith.mulf %286, %277 : vector<1x256xf32>
    %288 = arith.addf %284, %287 : vector<1x256xf32>
    %c3_172 = arith.constant 3 : index
    %c6_173 = arith.constant 6 : index
    %289 = memref.load %arg5[%c3_172, %c6_173] : memref<5x9xf32, #tpu.memory_space<smem>>
    %290 = vector.broadcast %289 : f32 to vector<1x256xf32>
    %291 = arith.mulf %290, %281 : vector<1x256xf32>
    %292 = arith.addf %288, %291 : vector<1x256xf32>
    %c3_174 = arith.constant 3 : index
    %c1_175 = arith.constant 1 : index
    %293 = memref.load %arg5[%c3_174, %c1_175] : memref<5x9xf32, #tpu.memory_space<smem>>
    %294 = vector.broadcast %293 : f32 to vector<1x256xf32>
    %295 = arith.mulf %294, %279 : vector<1x256xf32>
    %c3_176 = arith.constant 3 : index
    %c4_177 = arith.constant 4 : index
    %296 = memref.load %arg5[%c3_176, %c4_177] : memref<5x9xf32, #tpu.memory_space<smem>>
    %297 = vector.broadcast %296 : f32 to vector<1x256xf32>
    %298 = arith.mulf %297, %277 : vector<1x256xf32>
    %299 = arith.addf %295, %298 : vector<1x256xf32>
    %c3_178 = arith.constant 3 : index
    %c7_179 = arith.constant 7 : index
    %300 = memref.load %arg5[%c3_178, %c7_179] : memref<5x9xf32, #tpu.memory_space<smem>>
    %301 = vector.broadcast %300 : f32 to vector<1x256xf32>
    %302 = arith.mulf %301, %281 : vector<1x256xf32>
    %303 = arith.addf %299, %302 : vector<1x256xf32>
    %c3_180 = arith.constant 3 : index
    %c2_181 = arith.constant 2 : index
    %304 = memref.load %arg5[%c3_180, %c2_181] : memref<5x9xf32, #tpu.memory_space<smem>>
    %305 = vector.broadcast %304 : f32 to vector<1x256xf32>
    %306 = arith.mulf %305, %279 : vector<1x256xf32>
    %c3_182 = arith.constant 3 : index
    %c5_183 = arith.constant 5 : index
    %307 = memref.load %arg5[%c3_182, %c5_183] : memref<5x9xf32, #tpu.memory_space<smem>>
    %308 = vector.broadcast %307 : f32 to vector<1x256xf32>
    %309 = arith.mulf %308, %277 : vector<1x256xf32>
    %310 = arith.addf %306, %309 : vector<1x256xf32>
    %c3_184 = arith.constant 3 : index
    %c8_185 = arith.constant 8 : index
    %311 = memref.load %arg5[%c3_184, %c8_185] : memref<5x9xf32, #tpu.memory_space<smem>>
    %312 = vector.broadcast %311 : f32 to vector<1x256xf32>
    %313 = arith.mulf %312, %281 : vector<1x256xf32>
    %314 = arith.addf %310, %313 : vector<1x256xf32>
    %c1_i32_186 = arith.constant 1 : i32
    %315 = tpu.dynamic_rotate %292 by %c1_i32_186 dim 1 : vector<1x256xf32>, i32 -> vector<1x256xf32>
    %316 = arith.mulf %2, %315 : vector<1x256xf32>
    %317 = arith.addf %316, %303 : vector<1x256xf32>
    %c255_i32_187 = arith.constant 255 : i32
    %318 = tpu.dynamic_rotate %314 by %c255_i32_187 dim 1 : vector<1x256xf32>, i32 -> vector<1x256xf32>
    %319 = arith.mulf %3, %318 : vector<1x256xf32>
    %320 = arith.addf %317, %319 : vector<1x256xf32>
    %c3_188 = arith.constant 3 : index
    %321 = memref.load %arg6[%c3_188] : memref<5xf32, #tpu.memory_space<smem>>
    %cst_189 = arith.constant 0.000000e+00 : f32
    %322 = vector.broadcast %cst_189 : f32 to vector<1x256xf32>
    %323 = arith.maximumf %320, %322 : vector<1x256xf32>
    %324 = vector.broadcast %321 : f32 to vector<1x256xf32>
    %325 = arith.mulf %324, %323 : vector<1x256xf32>
    %326 = arith.addf %245, %325 : vector<1x256xf32>
    %c4_190 = arith.constant 4 : index
    %c0_191 = arith.constant 0 : index
    %327 = memref.load %arg3[%c4_190, %c0_191] : memref<5x5xf32, #tpu.memory_space<smem>>
    %c0_192 = arith.constant 0 : index
    %c0_193 = arith.constant 0 : index
    %c0_194 = arith.constant 0 : index
    %328 = vector.load %arg1[%c0_192, %c0_193, %c0_194] : memref<1x1x1280xf32, #tpu.memory_space<vmem>>, vector<1x1x256xf32>
    %329 = vector.shape_cast %328 : vector<1x1x256xf32> to vector<1x256xf32>
    %330 = vector.broadcast %327 : f32 to vector<1x256xf32>
    %331 = arith.mulf %330, %329 : vector<1x256xf32>
    %c4_195 = arith.constant 4 : index
    %c1_196 = arith.constant 1 : index
    %332 = memref.load %arg3[%c4_195, %c1_196] : memref<5x5xf32, #tpu.memory_space<smem>>
    %c0_197 = arith.constant 0 : index
    %c0_198 = arith.constant 0 : index
    %c256_199 = arith.constant 256 : index
    %333 = vector.load %arg1[%c0_197, %c0_198, %c256_199] : memref<1x1x1280xf32, #tpu.memory_space<vmem>>, vector<1x1x256xf32>
    %334 = vector.shape_cast %333 : vector<1x1x256xf32> to vector<1x256xf32>
    %335 = vector.broadcast %332 : f32 to vector<1x256xf32>
    %336 = arith.mulf %335, %334 : vector<1x256xf32>
    %337 = arith.addf %331, %336 : vector<1x256xf32>
    %c4_200 = arith.constant 4 : index
    %c2_201 = arith.constant 2 : index
    %338 = memref.load %arg3[%c4_200, %c2_201] : memref<5x5xf32, #tpu.memory_space<smem>>
    %c0_202 = arith.constant 0 : index
    %c0_203 = arith.constant 0 : index
    %c512_204 = arith.constant 512 : index
    %339 = vector.load %arg1[%c0_202, %c0_203, %c512_204] : memref<1x1x1280xf32, #tpu.memory_space<vmem>>, vector<1x1x256xf32>
    %340 = vector.shape_cast %339 : vector<1x1x256xf32> to vector<1x256xf32>
    %341 = vector.broadcast %338 : f32 to vector<1x256xf32>
    %342 = arith.mulf %341, %340 : vector<1x256xf32>
    %343 = arith.addf %337, %342 : vector<1x256xf32>
    %c4_205 = arith.constant 4 : index
    %c3_206 = arith.constant 3 : index
    %344 = memref.load %arg3[%c4_205, %c3_206] : memref<5x5xf32, #tpu.memory_space<smem>>
    %c0_207 = arith.constant 0 : index
    %c0_208 = arith.constant 0 : index
    %c768_209 = arith.constant 768 : index
    %345 = vector.load %arg1[%c0_207, %c0_208, %c768_209] : memref<1x1x1280xf32, #tpu.memory_space<vmem>>, vector<1x1x256xf32>
    %346 = vector.shape_cast %345 : vector<1x1x256xf32> to vector<1x256xf32>
    %347 = vector.broadcast %344 : f32 to vector<1x256xf32>
    %348 = arith.mulf %347, %346 : vector<1x256xf32>
    %349 = arith.addf %343, %348 : vector<1x256xf32>
    %c4_210 = arith.constant 4 : index
    %c4_211 = arith.constant 4 : index
    %350 = memref.load %arg3[%c4_210, %c4_211] : memref<5x5xf32, #tpu.memory_space<smem>>
    %c0_212 = arith.constant 0 : index
    %c0_213 = arith.constant 0 : index
    %c1024_214 = arith.constant 1024 : index
    %351 = vector.load %arg1[%c0_212, %c0_213, %c1024_214] : memref<1x1x1280xf32, #tpu.memory_space<vmem>>, vector<1x1x256xf32>
    %352 = vector.shape_cast %351 : vector<1x1x256xf32> to vector<1x256xf32>
    %353 = vector.broadcast %350 : f32 to vector<1x256xf32>
    %354 = arith.mulf %353, %352 : vector<1x256xf32>
    %355 = arith.addf %349, %354 : vector<1x256xf32>
    %c4_215 = arith.constant 4 : index
    %356 = memref.load %arg4[%c4_215] : memref<5xf32, #tpu.memory_space<smem>>
    %357 = vector.broadcast %356 : f32 to vector<1x256xf32>
    %358 = arith.addf %355, %357 : vector<1x256xf32>
    %c16_i32_216 = arith.constant 16 : i32
    %359 = tpu.dynamic_rotate %358 by %c16_i32_216 dim 1 : vector<1x256xf32>, i32 -> vector<1x256xf32>
    %360 = arith.mulf %0, %359 : vector<1x256xf32>
    %c240_i32_217 = arith.constant 240 : i32
    %361 = tpu.dynamic_rotate %358 by %c240_i32_217 dim 1 : vector<1x256xf32>, i32 -> vector<1x256xf32>
    %362 = arith.mulf %1, %361 : vector<1x256xf32>
    %c4_218 = arith.constant 4 : index
    %c0_219 = arith.constant 0 : index
    %363 = memref.load %arg5[%c4_218, %c0_219] : memref<5x9xf32, #tpu.memory_space<smem>>
    %364 = vector.broadcast %363 : f32 to vector<1x256xf32>
    %365 = arith.mulf %364, %360 : vector<1x256xf32>
    %c4_220 = arith.constant 4 : index
    %c3_221 = arith.constant 3 : index
    %366 = memref.load %arg5[%c4_220, %c3_221] : memref<5x9xf32, #tpu.memory_space<smem>>
    %367 = vector.broadcast %366 : f32 to vector<1x256xf32>
    %368 = arith.mulf %367, %358 : vector<1x256xf32>
    %369 = arith.addf %365, %368 : vector<1x256xf32>
    %c4_222 = arith.constant 4 : index
    %c6_223 = arith.constant 6 : index
    %370 = memref.load %arg5[%c4_222, %c6_223] : memref<5x9xf32, #tpu.memory_space<smem>>
    %371 = vector.broadcast %370 : f32 to vector<1x256xf32>
    %372 = arith.mulf %371, %362 : vector<1x256xf32>
    %373 = arith.addf %369, %372 : vector<1x256xf32>
    %c4_224 = arith.constant 4 : index
    %c1_225 = arith.constant 1 : index
    %374 = memref.load %arg5[%c4_224, %c1_225] : memref<5x9xf32, #tpu.memory_space<smem>>
    %375 = vector.broadcast %374 : f32 to vector<1x256xf32>
    %376 = arith.mulf %375, %360 : vector<1x256xf32>
    %c4_226 = arith.constant 4 : index
    %c4_227 = arith.constant 4 : index
    %377 = memref.load %arg5[%c4_226, %c4_227] : memref<5x9xf32, #tpu.memory_space<smem>>
    %378 = vector.broadcast %377 : f32 to vector<1x256xf32>
    %379 = arith.mulf %378, %358 : vector<1x256xf32>
    %380 = arith.addf %376, %379 : vector<1x256xf32>
    %c4_228 = arith.constant 4 : index
    %c7_229 = arith.constant 7 : index
    %381 = memref.load %arg5[%c4_228, %c7_229] : memref<5x9xf32, #tpu.memory_space<smem>>
    %382 = vector.broadcast %381 : f32 to vector<1x256xf32>
    %383 = arith.mulf %382, %362 : vector<1x256xf32>
    %384 = arith.addf %380, %383 : vector<1x256xf32>
    %c4_230 = arith.constant 4 : index
    %c2_231 = arith.constant 2 : index
    %385 = memref.load %arg5[%c4_230, %c2_231] : memref<5x9xf32, #tpu.memory_space<smem>>
    %386 = vector.broadcast %385 : f32 to vector<1x256xf32>
    %387 = arith.mulf %386, %360 : vector<1x256xf32>
    %c4_232 = arith.constant 4 : index
    %c5_233 = arith.constant 5 : index
    %388 = memref.load %arg5[%c4_232, %c5_233] : memref<5x9xf32, #tpu.memory_space<smem>>
    %389 = vector.broadcast %388 : f32 to vector<1x256xf32>
    %390 = arith.mulf %389, %358 : vector<1x256xf32>
    %391 = arith.addf %387, %390 : vector<1x256xf32>
    %c4_234 = arith.constant 4 : index
    %c8_235 = arith.constant 8 : index
    %392 = memref.load %arg5[%c4_234, %c8_235] : memref<5x9xf32, #tpu.memory_space<smem>>
    %393 = vector.broadcast %392 : f32 to vector<1x256xf32>
    %394 = arith.mulf %393, %362 : vector<1x256xf32>
    %395 = arith.addf %391, %394 : vector<1x256xf32>
    %c1_i32_236 = arith.constant 1 : i32
    %396 = tpu.dynamic_rotate %373 by %c1_i32_236 dim 1 : vector<1x256xf32>, i32 -> vector<1x256xf32>
    %397 = arith.mulf %2, %396 : vector<1x256xf32>
    %398 = arith.addf %397, %384 : vector<1x256xf32>
    %c255_i32_237 = arith.constant 255 : i32
    %399 = tpu.dynamic_rotate %395 by %c255_i32_237 dim 1 : vector<1x256xf32>, i32 -> vector<1x256xf32>
    %400 = arith.mulf %3, %399 : vector<1x256xf32>
    %401 = arith.addf %398, %400 : vector<1x256xf32>
    %c4_238 = arith.constant 4 : index
    %402 = memref.load %arg6[%c4_238] : memref<5xf32, #tpu.memory_space<smem>>
    %cst_239 = arith.constant 0.000000e+00 : f32
    %403 = vector.broadcast %cst_239 : f32 to vector<1x256xf32>
    %404 = arith.maximumf %401, %403 : vector<1x256xf32>
    %405 = vector.broadcast %402 : f32 to vector<1x256xf32>
    %406 = arith.mulf %405, %404 : vector<1x256xf32>
    %407 = arith.addf %326, %406 : vector<1x256xf32>
    %c0_240 = arith.constant 0 : index
    %408 = memref.load %arg7[%c0_240] : memref<1xf32, #tpu.memory_space<smem>>
    %409 = vector.broadcast %408 : f32 to vector<1x256xf32>
    %410 = arith.addf %407, %409 : vector<1x256xf32>
    %c0_241 = arith.constant 0 : index
    %c0_242 = arith.constant 0 : index
    %c0_243 = arith.constant 0 : index
    %411 = vector.load %arg8[%c0_241, %c0_242, %c0_243] : memref<1x1x256xf32, #tpu.memory_space<vmem>>, vector<1x1x256xf32>
    %412 = vector.shape_cast %411 : vector<1x1x256xf32> to vector<1x256xf32>
    %413 = vector.shape_cast %410 : vector<1x256xf32> to vector<1x1x256xf32>
    tpu.vector_store %arg8[%c0_241, %c0_242, %c0_243], %413 {strides = array<i32>} : memref<1x1x256xf32, #tpu.memory_space<vmem>>, vector<1x1x256xf32>,
    return
  }
  func.func @transform_0(%arg0: i32) -> (i32, i32, i32) {
    %c0_i32 = arith.constant 0 : i32
    %c0_i32_0 = arith.constant 0 : i32
    %c0_i32_1 = arith.constant 0 : i32
    return %arg0, %c0_i32, %c0_i32_0 : i32, i32, i32
  }
  func.func @transform_1(%arg0: i32) -> (i32, i32) {
    %c0_i32 = arith.constant 0 : i32
    %c0_i32_0 = arith.constant 0 : i32
    %c0_i32_1 = arith.constant 0 : i32
    return %c0_i32, %c0_i32_0 : i32, i32
  }
  func.func @transform_2(%arg0: i32) -> (i32, i32) {
    %c0_i32 = arith.constant 0 : i32
    %c0_i32_0 = arith.constant 0 : i32
    %c0_i32_1 = arith.constant 0 : i32
    return %c0_i32, %c0_i32_0 : i32, i32
  }
  func.func @transform_3(%arg0: i32) -> i32 {
    %c0_i32 = arith.constant 0 : i32
    %c0_i32_0 = arith.constant 0 : i32
    return %c0_i32 : i32
  }
  func.func @transform_4(%arg0: i32) -> (i32, i32) {
    %c0_i32 = arith.constant 0 : i32
    %c0_i32_0 = arith.constant 0 : i32
    %c0_i32_1 = arith.constant 0 : i32
    return %c0_i32, %c0_i32_0 : i32, i32
  }
  func.func @transform_5(%arg0: i32) -> i32 {
    %c0_i32 = arith.constant 0 : i32
    %c0_i32_0 = arith.constant 0 : i32
    return %c0_i32 : i32
  }
  func.func @transform_6(%arg0: i32) -> i32 {
    %c0_i32 = arith.constant 0 : i32
    %c0_i32_0 = arith.constant 0 : i32
    return %c0_i32 : i32
  }
  func.func @transform_7(%arg0: i32) -> (i32, i32, i32) {
    %c0_i32 = arith.constant 0 : i32
    %c0_i32_0 = arith.constant 0 : i32
    %c0_i32_1 = arith.constant 0 : i32
    return %arg0, %c0_i32, %c0_i32_0 : i32, i32, i32
  }
}

</mosaic_0001>

<llo_original>
// kernel: tpu_custom_call.1
$region0: #{tpu_custom_call.1}
  #allocation0 [shape = 'u32[]', space=smem, size = 0x4, offset = 0x4, fixed_abs, tag = 'smem constant byte address 0x4 - core index']
  #allocation1 [shape = 'u32[144,128]{1,0:T(1,128)}', space=vmem, size = 0x12000, scoped, tag = 'internal scratch']
  #allocation2 [shape = 'f32[1]{0:T(128)S(6)}', space=smem, size = 0x200, scoped, tag = 'scoped memory for tpu_custom_call.1']
  %s0 = inlined_call_operand.hbm [shape: f32[2,1,1280], index: 0, kind: input, shape index: {}]
  %s1 = inlined_call_operand.hbm [shape: f32[4,256], index: 1, kind: input, shape index: {}]
  %s2 = inlined_call_operand.vmem [shape: f32[5,5], index: 2, kind: input, shape index: {}]
  %s3 = inlined_call_operand.vmem [shape: f32[5], index: 3, kind: input, shape index: {}]
  %s4 = inlined_call_operand.vmem [shape: f32[5,9], index: 4, kind: input, shape index: {}]
  %s5 = inlined_call_operand.vmem [shape: f32[5], index: 5, kind: input, shape index: {}]
  %s6 = inlined_call_operand.<no memory space> [shape: f32[1], index: 6, kind: input, shape index: {}]
  %s7 = inlined_call_operand.hbm [shape: f32[2,1,256], index: 7, kind: output, shape index: {}]
  %s8 = sld [smem:[#allocation0]]
  $region85: #{tpu_custom_call.1} parent=0
    _
  %s10 = ssub.s32 1, %s8
  %s11 = scalar_select 0, %s10, %s8
  %12 = sst [smem:[#allocation2]] %s6
  $region1: #{tpu_custom_call.1} parent=0
    #allocation3 [shape = 'u8[10240]{0}', space=vmem, size = 0x2800, scoped, tag = 'input window, operand 0']
    #allocation4 [shape = 's32[2]{0}', space=sflag, size = 0x8, scoped, tag = 'scoped memory for tpu_custom_call.1']
    #allocation5 [shape = 's32[2]{0}', space=sflag, size = 0x8, scoped, tag = 'scoped memory for tpu_custom_call.1']
    #allocation6 [shape = 's32[2]{0}', space=sflag, size = 0x8, scoped, tag = 'scoped memory for tpu_custom_call.1']
    #allocation7 [shape = 'u8[4096]{0}', space=vmem, size = 0x1000, scoped, tag = 'input window, operand 1, single buffered']
    #allocation8 [shape = 's32[1]{0}', space=sflag, size = 0x4, scoped, tag = 'scoped memory for tpu_custom_call.1']
    #allocation9 [shape = 'u8[4096]{0}', space=smem, size = 0x1000, scoped, tag = 'input window, operand 2, single buffered']
    #allocation10 [shape = 'u8[512]{0}', space=smem, size = 0x200, scoped, tag = 'input window, operand 3, single buffered']
    #allocation11 [shape = 's32[1]{0}', space=sflag, size = 0x4, scoped, tag = 'scoped memory for tpu_custom_call.1']
    #allocation12 [shape = 'u8[4096]{0}', space=smem, size = 0x1000, scoped, tag = 'input window, operand 4, single buffered']
    #allocation13 [shape = 'u8[512]{0}', space=smem, size = 0x200, scoped, tag = 'input window, operand 5, single buffered']
    #allocation14 [shape = 's32[1]{0}', space=sflag, size = 0x4, scoped, tag = 'scoped memory for tpu_custom_call.1']
    #allocation15 [shape = 'u8[2048]{0}', space=vmem, size = 0x800, scoped, tag = 'output window, operand 0']
    %13 = vsyncpa [#allocation4], 0
    %s14 = scalar_lea.sflag [#allocation4], 1
    %15 = vsyncpa %s14, 0
    %16 = vsyncpa [#allocation8], 0
    %17 = vsyncpa [#allocation6], 0
    %18 = vsyncpa [#allocation11], 0
    %19 = vsyncpa [#allocation14], 0
    %20 = vsyncpa [#allocation5], 0
    %s21 = scalar_lea.sflag [#allocation5], 1
    %22 = vsyncpa %s21, 0
    loop: start=0, step=1, limit=4
    $region2: #{tpu_custom_call.1} parent=1 // loop_pre_header
      _
    $region3: #{tpu_custom_call.1} parent=1 // loop_header
      %s24 = sphi 0, %s28
      %p25 = scmp.ge.s32.totalorder %s24, 4
      %s34 = sphi 0, %s36
      %s37 = sphi 0, %s34
      %s38 = sphi 0, %s37
      %s54 = sphi 0, %s38
      %s58 = sphi 0, %s58
      %s60 = sphi 0, %s58
      %s61 = sphi 0, %s60
      %s75 = sphi 0, %s61
      %s79 = sphi 0, %s79
      %s81 = sphi 0, %s79
      %s82 = sphi 0, %s81
      %s96 = sphi 0, %s82
      %s100 = sphi 0, %s100
      %s102 = sphi 0, %s100
      %s103 = sphi 0, %s102
      %s117 = sphi 0, %s103
      %s121 = sphi 0, %s121
      %s123 = sphi 0, %s121
      %s124 = sphi 0, %s123
      %s138 = sphi 0, %s124
      %s142 = sphi 0, %s142
      %s144 = sphi 0, %s142
      %s145 = sphi 0, %s144
      %s159 = sphi 0, %s145
      %s163 = sphi 0, %s163
      %s165 = sphi 0, %s163
      %s166 = sphi 0, %s165
      %s180 = sphi 0, %s166
      %s186 = sphi 0, %s188
      %s189 = sphi 0, %s186
      %s190 = sphi 0, %s189
      %s206 = sphi 0, %s190
    $region4: #{tpu_custom_call.1} parent=1 // loop_header_branch
      %27 = sbr.rel (%p25) target = $region8
    $region5: #{tpu_custom_call.1} parent=1 // loop_body
      %s29 = ssub.s32 %s24, 1
      %s30 = ssub.s32 %s24, 2
      %s31 = sadd.s32 %s24, 1
      %s32 = ssub.s32 %s24, %s31
      %p33 = scmp.eq.s32.totalorder %s32, 0
      %s35 = sadd.s32 %s34, 1
      %s36 = scalar_select %p33, %s34, %s35
      %p39 = pneg %p33
      %p40 = scmp.eq.s32.totalorder %s24, 1
      %p41 = por %p39, %p40
      %p42 = scmp.ne.s32.totalorder %s34, %s37
      %p43 = scmp.eq.s32.totalorder %s24, 0
      %p44 = por %p42, %p43
      %p45 = scmp.ne.s32.totalorder %s34, %s37
      %p46 = scmp.eq.s32.totalorder %s29, 1
      %p47 = por %p45, %p46
      %p48 = scmp.ne.s32.totalorder %s37, %s38
      %p49 = scmp.eq.s32.totalorder %s29, 0
      %p50 = por %p48, %p49
      %p51 = scmp.ne.s32.totalorder %s37, %s38
      %p52 = scmp.eq.s32.totalorder %s30, 1
      %p53 = por %p51, %p52
      %p55 = scmp.ne.s32.totalorder %s38, %s54
      %p56 = scmp.eq.s32.totalorder %s30, 0
      %p57 = por %p55, %p56
      %s59 = sadd.s32 %s58, 1
      %p62 = scmp.eq.s32.totalorder %s24, 1
      %p63 = scmp.ne.s32.totalorder %s58, %s60
      %p64 = scmp.eq.s32.totalorder %s24, 0
      %p65 = por %p63, %p64
      %p66 = scmp.ne.s32.totalorder %s58, %s60
      %p67 = scmp.eq.s32.totalorder %s29, 1
      %p68 = por %p66, %p67
      %p69 = scmp.ne.s32.totalorder %s60, %s61
      %p70 = scmp.eq.s32.totalorder %s29, 0
      %p71 = por %p69, %p70
      %p72 = scmp.ne.s32.totalorder %s60, %s61
      %p73 = scmp.eq.s32.totalorder %s30, 1
      %p74 = por %p72, %p73
      %p76 = scmp.ne.s32.totalorder %s61, %s75
      %p77 = scmp.eq.s32.totalorder %s30, 0
      %p78 = por %p76, %p77
      %s80 = sadd.s32 %s79, 1
      %p83 = scmp.eq.s32.totalorder %s24, 1
      %p84 = scmp.ne.s32.totalorder %s79, %s81
      %p85 = scmp.eq.s32.totalorder %s24, 0
      %p86 = por %p84, %p85
      %p87 = scmp.ne.s32.totalorder %s79, %s81
      %p88 = scmp.eq.s32.totalorder %s29, 1
      %p89 = por %p87, %p88
      %p90 = scmp.ne.s32.totalorder %s81, %s82
      %p91 = scmp.eq.s32.totalorder %s29, 0
      %p92 = por %p90, %p91
      %p93 = scmp.ne.s32.totalorder %s81, %s82
      %p94 = scmp.eq.s32.totalorder %s30, 1
      %p95 = por %p93, %p94
      %p97 = scmp.ne.s32.totalorder %s82, %s96
      %p98 = scmp.eq.s32.totalorder %s30, 0
      %p99 = por %p97, %p98
      %s101 = sadd.s32 %s100, 1
      %p104 = scmp.eq.s32.totalorder %s24, 1
      %p105 = scmp.ne.s32.totalorder %s100, %s102
      %p106 = scmp.eq.s32.totalorder %s24, 0
      %p107 = por %p105, %p106
      %p108 = scmp.ne.s32.totalorder %s100, %s102
      %p109 = scmp.eq.s32.totalorder %s29, 1
      %p110 = por %p108, %p109
      %p111 = scmp.ne.s32.totalorder %s102, %s103
      %p112 = scmp.eq.s32.totalorder %s29, 0
      %p113 = por %p111, %p112
      %p114 = scmp.ne.s32.totalorder %s102, %s103
      %p115 = scmp.eq.s32.totalorder %s30, 1
      %p116 = por %p114, %p115
      %p118 = scmp.ne.s32.totalorder %s103, %s117
      %p119 = scmp.eq.s32.totalorder %s30, 0
      %p120 = por %p118, %p119
      %s122 = sadd.s32 %s121, 1
      %p125 = scmp.eq.s32.totalorder %s24, 1
      %p126 = scmp.ne.s32.totalorder %s121, %s123
      %p127 = scmp.eq.s32.totalorder %s24, 0
      %p128 = por %p126, %p127
      %p129 = scmp.ne.s32.totalorder %s121, %s123
      %p130 = scmp.eq.s32.totalorder %s29, 1
      %p131 = por %p129, %p130
      %p132 = scmp.ne.s32.totalorder %s123, %s124
      %p133 = scmp.eq.s32.totalorder %s29, 0
      %p134 = por %p132, %p133
      %p135 = scmp.ne.s32.totalorder %s123, %s124
      %p136 = scmp.eq.s32.totalorder %s30, 1
      %p137 = por %p135, %p136
      %p139 = scmp.ne.s32.totalorder %s124, %s138
      %p140 = scmp.eq.s32.totalorder %s30, 0
      %p141 = por %p139, %p140
      %s143 = sadd.s32 %s142, 1
      %p146 = scmp.eq.s32.totalorder %s24, 1
      %p147 = scmp.ne.s32.totalorder %s142, %s144
      %p148 = scmp.eq.s32.totalorder %s24, 0
      %p149 = por %p147, %p148
      %p150 = scmp.ne.s32.totalorder %s142, %s144
      %p151 = scmp.eq.s32.totalorder %s29, 1
      %p152 = por %p150, %p151
      %p153 = scmp.ne.s32.totalorder %s144, %s145
      %p154 = scmp.eq.s32.totalorder %s29, 0
      %p155 = por %p153, %p154
      %p156 = scmp.ne.s32.totalorder %s144, %s145
      %p157 = scmp.eq.s32.totalorder %s30, 1
      %p158 = por %p156, %p157
      %p160 = scmp.ne.s32.totalorder %s145, %s159
      %p161 = scmp.eq.s32.totalorder %s30, 0
      %p162 = por %p160, %p161
      %s164 = sadd.s32 %s163, 1
      %p167 = scmp.eq.s32.totalorder %s24, 1
      %p168 = scmp.ne.s32.totalorder %s163, %s165
      %p169 = scmp.eq.s32.totalorder %s24, 0
      %p170 = por %p168, %p169
      %p171 = scmp.ne.s32.totalorder %s163, %s165
      %p172 = scmp.eq.s32.totalorder %s29, 1
      %p173 = por %p171, %p172
      %p174 = scmp.ne.s32.totalorder %s165, %s166
      %p175 = scmp.eq.s32.totalorder %s29, 0
      %p176 = por %p174, %p175
      %p177 = scmp.ne.s32.totalorder %s165, %s166
      %p178 = scmp.eq.s32.totalorder %s30, 1
      %p179 = por %p177, %p178
      %p181 = scmp.ne.s32.totalorder %s166, %s180
      %p182 = scmp.eq.s32.totalorder %s30, 0
      %p183 = por %p181, %p182
      %s184 = ssub.s32 %s24, %s31
      %p185 = scmp.eq.s32.totalorder %s184, 0
      %s187 = sadd.s32 %s186, 1
      %s188 = scalar_select %p185, %s186, %s187
      %p191 = pneg %p185
      %p192 = scmp.eq.s32.totalorder %s24, 1
      %p193 = por %p191, %p192
      %p194 = scmp.ne.s32.totalorder %s186, %s189
      %p195 = scmp.eq.s32.totalorder %s24, 0
      %p196 = por %p194, %p195
      %p197 = scmp.ne.s32.totalorder %s186, %s189
      %p198 = scmp.eq.s32.totalorder %s29, 1
      %p199 = por %p197, %p198
      %p200 = scmp.ne.s32.totalorder %s189, %s190
      %p201 = scmp.eq.s32.totalorder %s29, 0
      %p202 = por %p200, %p201
      %p203 = scmp.ne.s32.totalorder %s189, %s190
      %p204 = scmp.eq.s32.totalorder %s30, 1
      %p205 = por %p203, %p204
      %p207 = scmp.ne.s32.totalorder %s190, %s206
      %p208 = scmp.eq.s32.totalorder %s30, 0
      %p209 = por %p207, %p208
      %p210 = scmp.le.s32.totalorder 1, %s24
      %p211 = scmp.lt.s32.totalorder %s24, 3
      %p212 = pnand %p210, %p211
      %p213 = pneg %p212
      // Predicated region
      $region9: #{tpu_custom_call.1} parent=5 // pred_check
        _
      $region10: #{tpu_custom_call.1} parent=5 // pred_check_branch
        %215 = sbr.rel (%p212) target = $region12
      $region11: #{tpu_custom_call.1} parent=5 // pred_region
        %s216 = ssub.s32 %s24, 1
        // Predicated region
        $region13: #{tpu_custom_call.1} parent=11 // pred_check
          %p217 = pneg %p71
        $region14: #{tpu_custom_call.1} parent=11 // pred_check_branch
          %219 = sbr.rel (%p217) target = $region16
        $region15: #{tpu_custom_call.1} parent=11 // pred_region
          %s221 = ssub.s32 128, 128
          %222 = vsyncadd [#allocation8], %s221
          %s224 = sshll.u32 [#allocation7], 4
          %s225 = int_to_ptr.vmem [resolvable:$true] %s224
          %227 = dma.hbm_to_vmem [thread:$0]  %s1, 128, %s225, [#allocation8]
        $region16: #{tpu_custom_call.1} parent=11 // pred_fallthru
          _
        // Predicated region
        $region17: #{tpu_custom_call.1} parent=11 // pred_check
          %p228 = pneg %p92
        $region18: #{tpu_custom_call.1} parent=11 // pred_check_branch
          %230 = sbr.rel (%p228) target = $region20
        $region19: #{tpu_custom_call.1} parent=11 // pred_region
          %s232 = ssub.s32 128, 128
          %233 = vsyncadd [#allocation6], %s232
          %s235 = sshll.u32 %s2, 4
          %s236 = int_to_ptr.vmem [resolvable:$true] %s235
          %238 = dma.vmem_to_smem %s236, 128, [#allocation9], [#allocation6]
        $region20: #{tpu_custom_call.1} parent=11 // pred_fallthru
          _
        // Predicated region
        $region21: #{tpu_custom_call.1} parent=11 // pred_check
          %p239 = pneg %p113
        $region22: #{tpu_custom_call.1} parent=11 // pred_check_branch
          %241 = sbr.rel (%p239) target = $region24
        $region23: #{tpu_custom_call.1} parent=11 // pred_region
          %s243 = ssub.s32 16, 16
          %244 = vsyncadd [#allocation11], %s243
          %s246 = sshll.u32 %s3, 4
          %s247 = int_to_ptr.vmem [resolvable:$true] %s246
          %249 = dma.vmem_to_smem %s247, 16, [#allocation10], [#allocation11]
        $region24: #{tpu_custom_call.1} parent=11 // pred_fallthru
          _
        // Predicated region
        $region25: #{tpu_custom_call.1} parent=11 // pred_check
          %p250 = pneg %p134
        $region26: #{tpu_custom_call.1} parent=11 // pred_check_branch
          %252 = sbr.rel (%p250) target = $region28
        $region27: #{tpu_custom_call.1} parent=11 // pred_region
          %s254 = ssub.s32 128, 128
          %255 = vsyncadd [#allocation11], %s254
          %s257 = sshll.u32 %s4, 4
          %s258 = int_to_ptr.vmem [resolvable:$true] %s257
          %260 = dma.vmem_to_smem %s258, 128, [#allocation12], [#allocation11]
        $region28: #{tpu_custom_call.1} parent=11 // pred_fallthru
          _
        // Predicated region
        $region29: #{tpu_custom_call.1} parent=11 // pred_check
          %p261 = pneg %p155
        $region30: #{tpu_custom_call.1} parent=11 // pred_check_branch
          %263 = sbr.rel (%p261) target = $region32
        $region31: #{tpu_custom_call.1} parent=11 // pred_region
          %s265 = ssub.s32 16, 16
          %266 = vsyncadd [#allocation14], %s265
          %s268 = sshll.u32 %s5, 4
          %s269 = int_to_ptr.vmem [resolvable:$true] %s268
          %271 = dma.vmem_to_smem %s269, 16, [#allocation13], [#allocation14]
        $region32: #{tpu_custom_call.1} parent=11 // pred_fallthru
          _
        // Predicated region
        $region33: #{tpu_custom_call.1} parent=11 // pred_check
          %p272 = pneg %p176
        $region34: #{tpu_custom_call.1} parent=11 // pred_check_branch
          %274 = sbr.rel (%p272) target = $region36
        $region35: #{tpu_custom_call.1} parent=11 // pred_region
          _
        $region36: #{tpu_custom_call.1} parent=11 // pred_fallthru
          _
      $region12: #{tpu_custom_call.1} parent=5 // pred_fallthru
        _
      %p275 = scmp.lt.s32.totalorder %s24, 2
      // Predicated region
      $region37: #{tpu_custom_call.1} parent=5 // pred_check
        %p276 = pneg %p275
      $region38: #{tpu_custom_call.1} parent=5 // pred_check_branch
        %278 = sbr.rel (%p276) target = $region40
      $region39: #{tpu_custom_call.1} parent=5 // pred_region
        // Predicated region
        $region41: #{tpu_custom_call.1} parent=39 // pred_check
          %p279 = pneg %p44
        $region42: #{tpu_custom_call.1} parent=39 // pred_check_branch
          %281 = sbr.rel (%p279) target = $region44
        $region43: #{tpu_custom_call.1} parent=39 // pred_region
          %s282 = sand.u32 %s34, 1
          %s283 = scalar_lea.sflag [#allocation4], %s282
          %s284 = sand.u32 %s34, 1
          %s285 = smul.addr %s284, 10
          %s286 = scalar_lea.vmem [#allocation3], %s285
          %s288 = ssub.s32 160, 160
          %289 = vsyncadd %s283, %s288
          %s290 = smul.addr %s24, 10
          %s291 = smul.addr %s290, 16
          %s292 = scalar_lea.hbm %s0, %s291
          %s294 = sshll.u32 %s286, 4
          %s295 = int_to_ptr.vmem [resolvable:$true] %s294
          %297 = dma.hbm_to_vmem [thread:$0]  %s292, 160, %s295, %s283
        $region44: #{tpu_custom_call.1} parent=39 // pred_fallthru
          _
      $region40: #{tpu_custom_call.1} parent=5 // pred_fallthru
        _
      %p298 = scmp.le.s32.totalorder 1, %s24
      %p299 = scmp.lt.s32.totalorder %s24, 3
      %p300 = pnand %p298, %p299
      %p301 = pneg %p300
      // Predicated region
      $region45: #{tpu_custom_call.1} parent=5 // pred_check
        _
      $region46: #{tpu_custom_call.1} parent=5 // pred_check_branch
        %303 = sbr.rel (%p300) target = $region48
      $region47: #{tpu_custom_call.1} parent=5 // pred_region
        %s304 = ssub.s32 %s24, 1
        %s305 = sand.u32 %s37, 1
        %s306 = scalar_lea.sflag [#allocation4], %s305
        %s307 = sand.u32 %s37, 1
        %s308 = smul.addr %s307, 10
        %s309 = scalar_lea.vmem [#allocation3], %s308
        // Predicated region
        $region49: #{tpu_custom_call.1} parent=47 // pred_check
          %p310 = pneg %p50
        $region50: #{tpu_custom_call.1} parent=47 // pred_check_branch
          %312 = sbr.rel (%p310) target = $region52
        $region51: #{tpu_custom_call.1} parent=47 // pred_region
          %313 = dma.done %s306, 160
        $region52: #{tpu_custom_call.1} parent=47 // pred_fallthru
          _
        // Predicated region
        $region53: #{tpu_custom_call.1} parent=47 // pred_check
          %p314 = pneg %p71
        $region54: #{tpu_custom_call.1} parent=47 // pred_check_branch
          %316 = sbr.rel (%p314) target = $region56
        $region55: #{tpu_custom_call.1} parent=47 // pred_region
          %317 = dma.done [#allocation8], 128
        $region56: #{tpu_custom_call.1} parent=47 // pred_fallthru
          _
        // Predicated region
        $region57: #{tpu_custom_call.1} parent=47 // pred_check
          %p318 = pneg %p92
        $region58: #{tpu_custom_call.1} parent=47 // pred_check_branch
          %320 = sbr.rel (%p318) target = $region60
        $region59: #{tpu_custom_call.1} parent=47 // pred_region
          %321 = dma.done [#allocation6], 128
        $region60: #{tpu_custom_call.1} parent=47 // pred_fallthru
          _
        // Predicated region
        $region61: #{tpu_custom_call.1} parent=47 // pred_check
          %p322 = pneg %p113
        $region62: #{tpu_custom_call.1} parent=47 // pred_check_branch
          %324 = sbr.rel (%p322) target = $region64
        $region63: #{tpu_custom_call.1} parent=47 // pred_region
          %325 = dma.done [#allocation11], 16
        $region64: #{tpu_custom_call.1} parent=47 // pred_fallthru
          _
        // Predicated region
        $region65: #{tpu_custom_call.1} parent=47 // pred_check
          %p326 = pneg %p134
        $region66: #{tpu_custom_call.1} parent=47 // pred_check_branch
          %328 = sbr.rel (%p326) target = $region68
        $region67: #{tpu_custom_call.1} parent=47 // pred_region
          %329 = dma.done [#allocation11], 128
        $region68: #{tpu_custom_call.1} parent=47 // pred_fallthru
          _
        // Predicated region
        $region69: #{tpu_custom_call.1} parent=47 // pred_check
          %p330 = pneg %p155
        $region70: #{tpu_custom_call.1} parent=47 // pred_check_branch
          %332 = sbr.rel (%p330) target = $region72
        $region71: #{tpu_custom_call.1} parent=47 // pred_region
          %333 = dma.done [#allocation14], 16
        $region72: #{tpu_custom_call.1} parent=47 // pred_fallthru
          _
        %334 = sfence
        %s335 = sand.u32 %s37, 1
        %s336 = scalar_lea.sflag [#allocation4], %s335
        %s337 = sand.u32 %s37, 1
        %s338 = smul.addr %s337, 10
        %s339 = scalar_lea.vmem [#allocation3], %s338
        %p340 = pneg %p50
        %p341 = pneg %p47
        %p342 = pneg %p71
        %p343 = pneg %p68
        %p344 = pneg %p92
        %p345 = pneg %p89
        %p346 = pneg %p113
        %p347 = pneg %p110
        %p348 = pneg %p134
        %p349 = pneg %p131
        %p350 = pneg %p155
        %p351 = pneg %p152
        %p352 = pneg %p176
        %p353 = pneg %p173
        %p354 = pneg %p202
        %p355 = pneg %p199
        %s356 = sand.u32 %s189, 1
        %s357 = scalar_lea.sflag [#allocation5], %s356
        %s358 = sand.u32 %s189, 1
        %s359 = smul.addr %s358, 2
        %s360 = scalar_lea.vmem [#allocation15], %s359
        %v361 = vld [vmem:[#allocation7] ss:$4 sm:$0x3]
        %s362 = scalar_lea.vmem [#allocation7], 1
        %v363 = vld [vmem:[%s362] ss:$4 sm:$0x3]
        %s364 = scalar_lea.vmem [#allocation7], 2
        %v365 = vld [vmem:[%s364] ss:$4 sm:$0x3]
        %s366 = scalar_lea.vmem [#allocation7], 3
        %v367 = vld [vmem:[%s366] ss:$4 sm:$0x3]
        %s368 = sld [smem:[#allocation9]]
        %v369 = vld [vmem:[%s309] sm:$0x3]
        %v370 = vstv %s368
        %v371 = vmul.f32 %v370, %v369
        %s372 = sld [smem:[#allocation9 + $0x1]]
        %v373 = vld [vmem:[%s309 + $0x2] sm:$0x3]
        %v374 = vstv %s372
        %v375 = vmul.f32 %v374, %v373
        %v376 = vadd.f32 %v371, %v375
        %s377 = sld [smem:[#allocation9 + $0x2]]
        %v378 = vld [vmem:[%s309 + $0x4] sm:$0x3]
        %v379 = vstv %s377
        %v380 = vmul.f32 %v379, %v378
        %v381 = vadd.f32 %v376, %v380
        %s382 = sld [smem:[#allocation9 + $0x3]]
        %v383 = vld [vmem:[%s309 + $0x6] sm:$0x3]
        %v384 = vstv %s382
        %v385 = vmul.f32 %v384, %v383
        %v386 = vadd.f32 %v381, %v385
        %s387 = sld [smem:[#allocation9 + $0x4]]
        %v388 = vld [vmem:[%s309 + $0x8] sm:$0x3]
        %v389 = vstv %s387
        %v390 = vmul.f32 %v389, %v388
        %v391 = vadd.f32 %v386, %v390
        %s392 = sld [smem:[#allocation10]]
        %v393 = vstv %s392
        %v394 = vadd.f32 %v391, %v393
        %v396 = vlaneseq
        %v397 = vshrl.u32 %v396, 7
        %v398 = vsub.s32 0, %v397
        %v399 = vrot.slane %v394, %v398
        %v400 = vlaneseq
        %v401 = vshrl.u32 %v400, 7
        %v402 = vsub.s32 1, %v401
        %v403 = vrot.slane %v394, %v402
        %406 = vrot.lane.b32.xlu0 %v399, 16
        %v407 = vpop.permute.xlu0 %406
        %408 = vrot.lane.b32.xlu0 %v403, 16
        %v409 = vpop.permute.xlu0 %408
        %v410 = vlaneseq
        %v411 = vand.u32 %v410, 127
        %vm412 = vcmp.lt.s32.totalorder %v411, 16
        %v413 = vsel %vm412, %v407, %v409
        %v414 = vsel %vm412, %v409, %v407
        %v417 = vcombine.low %v414, %v413
        %v419 = vunpack.c.l.s4 1966171168
        %v420 = vunpack.c.0.s8 %v419
        %v421 = vlaneseq
        %v422 = vshrl.u32 %v421, 7
        %v423 = vsub.s32 %v420, %v422
        %v424 = vrot.slane %v417, %v423
        %v426 = vunpack.c.l.s4 1966171168
        %v427 = vunpack.c.0.s8 %v426
        %v428 = vlaneseq
        %v429 = vshrl.u32 %v428, 7
        %v430 = vsub.s32 %v427, %v429
        %v431 = vrot.slane %v424, %v430
        %v433 = vmul.f32 %v361, %v431
        %434 = vrot.lane.b32.xlu0 %v399, 112
        %v435 = vpop.permute.xlu0 %434
        %436 = vrot.lane.b32.xlu0 %v403, 112
        %v437 = vpop.permute.xlu0 %436
        %vm438 = vcmp.lt.s32.totalorder %v411, 112
        %v439 = vsel %vm438, %v435, %v437
        %v440 = vsel %vm438, %v437, %v435
        %v443 = vcombine.low %v439, %v440
        %v445 = vunpack.c.l.s4 1966171168
        %v446 = vunpack.c.0.s8 %v445
        %v447 = vlaneseq
        %v448 = vshrl.u32 %v447, 7
        %v449 = vsub.s32 %v446, %v448
        %v450 = vrot.slane %v443, %v449
        %v452 = vunpack.c.l.s4 1966171168
        %v453 = vunpack.c.0.s8 %v452
        %v454 = vlaneseq
        %v455 = vshrl.u32 %v454, 7
        %v456 = vsub.s32 %v453, %v455
        %v457 = vrot.slane %v450, %v456
        %v459 = vmul.f32 %v363, %v457
        %s460 = sld [smem:[#allocation12]]
        %v461 = vstv %s460
        %v462 = vmul.f32 %v461, %v433
        %s463 = sld [smem:[#allocation12 + $0x3]]
        %v464 = vstv %s463
        %v465 = vmul.f32 %v464, %v394
        %v466 = vadd.f32 %v462, %v465
        %s467 = sld [smem:[#allocation12 + $0x6]]
        %v468 = vstv %s467
        %v469 = vmul.f32 %v468, %v459
        %v470 = vadd.f32 %v466, %v469
        %s471 = sld [smem:[#allocation12 + $0x1]]
        %v472 = vstv %s471
        %v473 = vmul.f32 %v472, %v433
        %s474 = sld [smem:[#allocation12 + $0x4]]
        %v475 = vstv %s474
        %v476 = vmul.f32 %v475, %v394
        %v477 = vadd.f32 %v473, %v476
        %s478 = sld [smem:[#allocation12 + $0x7]]
        %v479 = vstv %s478
        %v480 = vmul.f32 %v479, %v459
        %v481 = vadd.f32 %v477, %v480
        %s482 = sld [smem:[#allocation12 + $0x2]]
        %v483 = vstv %s482
        %v484 = vmul.f32 %v483, %v433
        %s485 = sld [smem:[#allocation12 + $0x5]]
        %v486 = vstv %s485
        %v487 = vmul.f32 %v486, %v394
        %v488 = vadd.f32 %v484, %v487
        %s489 = sld [smem:[#allocation12 + $0x8]]
        %v490 = vstv %s489
        %v491 = vmul.f32 %v490, %v459
        %v492 = vadd.f32 %v488, %v491
        %v494 = vlaneseq
        %v495 = vshrl.u32 %v494, 7
        %v496 = vsub.s32 0, %v495
        %v497 = vrot.slane %v470, %v496
        %v498 = vlaneseq
        %v499 = vshrl.u32 %v498, 7
        %v500 = vsub.s32 1, %v499
        %v501 = vrot.slane %v470, %v500
        %504 = vrot.lane.b32.xlu0 %v497, 1
        %v505 = vpop.permute.xlu0 %504
        %506 = vrot.lane.b32.xlu0 %v501, 1
        %v507 = vpop.permute.xlu0 %506
        %vm508 = vcmp.lt.s32.totalorder %v411, 1
        %v509 = vsel %vm508, %v505, %v507
        %v510 = vsel %vm508, %v507, %v505
        %v513 = vcombine.low %v510, %v509
        %v515 = vunpack.c.l.s4 1966171168
        %v516 = vunpack.c.0.s8 %v515
        %v517 = vlaneseq
        %v518 = vshrl.u32 %v517, 7
        %v519 = vsub.s32 %v516, %v518
        %v520 = vrot.slane %v513, %v519
        %v522 = vunpack.c.l.s4 1966171168
        %v523 = vunpack.c.0.s8 %v522
        %v524 = vlaneseq
        %v525 = vshrl.u32 %v524, 7
        %v526 = vsub.s32 %v523, %v525
        %v527 = vrot.slane %v520, %v526
        %v529 = vmul.f32 %v365, %v527
        %v530 = vadd.f32 %v529, %v481
        %v532 = vlaneseq
        %v533 = vshrl.u32 %v532, 7
        %v534 = vsub.s32 0, %v533
        %v535 = vrot.slane %v492, %v534
        %v536 = vlaneseq
        %v537 = vshrl.u32 %v536, 7
        %v538 = vsub.s32 1, %v537
        %v539 = vrot.slane %v492, %v538
        %542 = vrot.lane.b32.xlu0 %v535, 127
        %v543 = vpop.permute.xlu0 %542
        %544 = vrot.lane.b32.xlu0 %v539, 127
        %v545 = vpop.permute.xlu0 %544
        %vm546 = vcmp.lt.s32.totalorder %v411, 127
        %v547 = vsel %vm546, %v543, %v545
        %v548 = vsel %vm546, %v545, %v543
        %v551 = vcombine.low %v547, %v548
        %v553 = vunpack.c.l.s4 1966171168
        %v554 = vunpack.c.0.s8 %v553
        %v555 = vlaneseq
        %v556 = vshrl.u32 %v555, 7
        %v557 = vsub.s32 %v554, %v556
        %v558 = vrot.slane %v551, %v557
        %v560 = vunpack.c.l.s4 1966171168
        %v561 = vunpack.c.0.s8 %v560
        %v562 = vlaneseq
        %v563 = vshrl.u32 %v562, 7
        %v564 = vsub.s32 %v561, %v563
        %v565 = vrot.slane %v558, %v564
        %v567 = vmul.f32 %v367, %v565
        %v568 = vadd.f32 %v530, %v567
        %s569 = sld [smem:[#allocation13]]
        %v570 = vmax.f32 %v568, 0.0
        %v571 = vstv %s569
        %v572 = vmul.f32 %v571, %v570
        %s573 = sld [smem:[#allocation9 + $0x80]]
        %v574 = vstv %s573
        %v575 = vmul.f32 %v574, %v369
        %s576 = sld [smem:[#allocation9 + $0x81]]
        %v577 = vstv %s576
        %v578 = vmul.f32 %v577, %v373
        %v579 = vadd.f32 %v575, %v578
        %s580 = sld [smem:[#allocation9 + $0x82]]
        %v581 = vstv %s580
        %v582 = vmul.f32 %v581, %v378
        %v583 = vadd.f32 %v579, %v582
        %s584 = sld [smem:[#allocation9 + $0x83]]
        %v585 = vstv %s584
        %v586 = vmul.f32 %v585, %v383
        %v587 = vadd.f32 %v583, %v586
        %s588 = sld [smem:[#allocation9 + $0x84]]
        %v589 = vstv %s588
        %v590 = vmul.f32 %v589, %v388
        %v591 = vadd.f32 %v587, %v590
        %s592 = sld [smem:[#allocation10 + $0x1]]
        %v593 = vstv %s592
        %v594 = vadd.f32 %v591, %v593
        %v596 = vlaneseq
        %v597 = vshrl.u32 %v596, 7
        %v598 = vsub.s32 0, %v597
        %v599 = vrot.slane %v594, %v598
        %v600 = vlaneseq
        %v601 = vshrl.u32 %v600, 7
        %v602 = vsub.s32 1, %v601
        %v603 = vrot.slane %v594, %v602
        %606 = vrot.lane.b32.xlu0 %v599, 16
        %v607 = vpop.permute.xlu0 %606
        %608 = vrot.lane.b32.xlu0 %v603, 16
        %v609 = vpop.permute.xlu0 %608
        %v610 = vsel %vm412, %v607, %v609
        %v611 = vsel %vm412, %v609, %v607
        %v614 = vcombine.low %v611, %v610
        %v616 = vunpack.c.l.s4 1966171168
        %v617 = vunpack.c.0.s8 %v616
        %v618 = vlaneseq
        %v619 = vshrl.u32 %v618, 7
        %v620 = vsub.s32 %v617, %v619
        %v621 = vrot.slane %v614, %v620
        %v623 = vunpack.c.l.s4 1966171168
        %v624 = vunpack.c.0.s8 %v623
        %v625 = vlaneseq
        %v626 = vshrl.u32 %v625, 7
        %v627 = vsub.s32 %v624, %v626
        %v628 = vrot.slane %v621, %v627
        %v630 = vmul.f32 %v361, %v628
        %631 = vrot.lane.b32.xlu0 %v599, 112
        %v632 = vpop.permute.xlu0 %631
        %633 = vrot.lane.b32.xlu0 %v603, 112
        %v634 = vpop.permute.xlu0 %633
        %v635 = vsel %vm438, %v632, %v634
        %v636 = vsel %vm438, %v634, %v632
        %v639 = vcombine.low %v635, %v636
        %v641 = vunpack.c.l.s4 1966171168
        %v642 = vunpack.c.0.s8 %v641
        %v643 = vlaneseq
        %v644 = vshrl.u32 %v643, 7
        %v645 = vsub.s32 %v642, %v644
        %v646 = vrot.slane %v639, %v645
        %v648 = vunpack.c.l.s4 1966171168
        %v649 = vunpack.c.0.s8 %v648
        %v650 = vlaneseq
        %v651 = vshrl.u32 %v650, 7
        %v652 = vsub.s32 %v649, %v651
        %v653 = vrot.slane %v646, %v652
        %v655 = vmul.f32 %v363, %v653
        %s656 = sld [smem:[#allocation12 + $0x80]]
        %v657 = vstv %s656
        %v658 = vmul.f32 %v657, %v630
        %s659 = sld [smem:[#allocation12 + $0x83]]
        %v660 = vstv %s659
        %v661 = vmul.f32 %v660, %v594
        %v662 = vadd.f32 %v658, %v661
        %s663 = sld [smem:[#allocation12 + $0x86]]
        %v664 = vstv %s663
        %v665 = vmul.f32 %v664, %v655
        %v666 = vadd.f32 %v662, %v665
        %s667 = sld [smem:[#allocation12 + $0x81]]
        %v668 = vstv %s667
        %v669 = vmul.f32 %v668, %v630
        %s670 = sld [smem:[#allocation12 + $0x84]]
        %v671 = vstv %s670
        %v672 = vmul.f32 %v671, %v594
        %v673 = vadd.f32 %v669, %v672
        %s674 = sld [smem:[#allocation12 + $0x87]]
        %v675 = vstv %s674
        %v676 = vmul.f32 %v675, %v655
        %v677 = vadd.f32 %v673, %v676
        %s678 = sld [smem:[#allocation12 + $0x82]]
        %v679 = vstv %s678
        %v680 = vmul.f32 %v679, %v630
        %s681 = sld [smem:[#allocation12 + $0x85]]
        %v682 = vstv %s681
        %v683 = vmul.f32 %v682, %v594
        %v684 = vadd.f32 %v680, %v683
        %s685 = sld [smem:[#allocation12 + $0x88]]
        %v686 = vstv %s685
        %v687 = vmul.f32 %v686, %v655
        %v688 = vadd.f32 %v684, %v687
        %v690 = vlaneseq
        %v691 = vshrl.u32 %v690, 7
        %v692 = vsub.s32 0, %v691
        %v693 = vrot.slane %v666, %v692
        %v694 = vlaneseq
        %v695 = vshrl.u32 %v694, 7
        %v696 = vsub.s32 1, %v695
        %v697 = vrot.slane %v666, %v696
        %700 = vrot.lane.b32.xlu0 %v693, 1
        %v701 = vpop.permute.xlu0 %700
        %702 = vrot.lane.b32.xlu0 %v697, 1
        %v703 = vpop.permute.xlu0 %702
        %v704 = vsel %vm508, %v701, %v703
        %v705 = vsel %vm508, %v703, %v701
        %v708 = vcombine.low %v705, %v704
        %v710 = vunpack.c.l.s4 1966171168
        %v711 = vunpack.c.0.s8 %v710
        %v712 = vlaneseq
        %v713 = vshrl.u32 %v712, 7
        %v714 = vsub.s32 %v711, %v713
        %v715 = vrot.slane %v708, %v714
        %v717 = vunpack.c.l.s4 1966171168
        %v718 = vunpack.c.0.s8 %v717
        %v719 = vlaneseq
        %v720 = vshrl.u32 %v719, 7
        %v721 = vsub.s32 %v718, %v720
        %v722 = vrot.slane %v715, %v721
        %v724 = vmul.f32 %v365, %v722
        %v725 = vadd.f32 %v724, %v677
        %v727 = vlaneseq
        %v728 = vshrl.u32 %v727, 7
        %v729 = vsub.s32 0, %v728
        %v730 = vrot.slane %v688, %v729
        %v731 = vlaneseq
        %v732 = vshrl.u32 %v731, 7
        %v733 = vsub.s32 1, %v732
        %v734 = vrot.slane %v688, %v733
        %737 = vrot.lane.b32.xlu0 %v730, 127
        %v738 = vpop.permute.xlu0 %737
        %739 = vrot.lane.b32.xlu0 %v734, 127
        %v740 = vpop.permute.xlu0 %739
        %v741 = vsel %vm546, %v738, %v740
        %v742 = vsel %vm546, %v740, %v738
        %v745 = vcombine.low %v741, %v742
        %v747 = vunpack.c.l.s4 1966171168
        %v748 = vunpack.c.0.s8 %v747
        %v749 = vlaneseq
        %v750 = vshrl.u32 %v749, 7
        %v751 = vsub.s32 %v748, %v750
        %v752 = vrot.slane %v745, %v751
        %v754 = vunpack.c.l.s4 1966171168
        %v755 = vunpack.c.0.s8 %v754
        %v756 = vlaneseq
        %v757 = vshrl.u32 %v756, 7
        %v758 = vsub.s32 %v755, %v757
        %v759 = vrot.slane %v752, %v758
        %v761 = vmul.f32 %v367, %v759
        %v762 = vadd.f32 %v725, %v761
        %s763 = sld [smem:[#allocation13 + $0x1]]
        %v764 = vmax.f32 %v762, 0.0
        %v765 = vstv %s763
        %v766 = vmul.f32 %v765, %v764
        %v767 = vadd.f32 %v572, %v766
        %s768 = sld [smem:[#allocation9 + $0x100]]
        %v769 = vstv %s768
        %v770 = vmul.f32 %v769, %v369
        %s771 = sld [smem:[#allocation9 + $0x101]]
        %v772 = vstv %s771
        %v773 = vmul.f32 %v772, %v373
        %v774 = vadd.f32 %v770, %v773
        %s775 = sld [smem:[#allocation9 + $0x102]]
        %v776 = vstv %s775
        %v777 = vmul.f32 %v776, %v378
        %v778 = vadd.f32 %v774, %v777
        %s779 = sld [smem:[#allocation9 + $0x103]]
        %v780 = vstv %s779
        %v781 = vmul.f32 %v780, %v383
        %v782 = vadd.f32 %v778, %v781
        %s783 = sld [smem:[#allocation9 + $0x104]]
        %v784 = vstv %s783
        %v785 = vmul.f32 %v784, %v388
        %v786 = vadd.f32 %v782, %v785
        %s787 = sld [smem:[#allocation10 + $0x2]]
        %v788 = vstv %s787
        %v789 = vadd.f32 %v786, %v788
        %v791 = vlaneseq
        %v792 = vshrl.u32 %v791, 7
        %v793 = vsub.s32 0, %v792
        %v794 = vrot.slane %v789, %v793
        %v795 = vlaneseq
        %v796 = vshrl.u32 %v795, 7
        %v797 = vsub.s32 1, %v796
        %v798 = vrot.slane %v789, %v797
        %801 = vrot.lane.b32.xlu0 %v794, 16
        %v802 = vpop.permute.xlu0 %801
        %803 = vrot.lane.b32.xlu0 %v798, 16
        %v804 = vpop.permute.xlu0 %803
        %v805 = vsel %vm412, %v802, %v804
        %v806 = vsel %vm412, %v804, %v802
        %v809 = vcombine.low %v806, %v805
        %v811 = vunpack.c.l.s4 1966171168
        %v812 = vunpack.c.0.s8 %v811
        %v813 = vlaneseq
        %v814 = vshrl.u32 %v813, 7
        %v815 = vsub.s32 %v812, %v814
        %v816 = vrot.slane %v809, %v815
        %v818 = vunpack.c.l.s4 1966171168
        %v819 = vunpack.c.0.s8 %v818
        %v820 = vlaneseq
        %v821 = vshrl.u32 %v820, 7
        %v822 = vsub.s32 %v819, %v821
        %v823 = vrot.slane %v816, %v822
        %v825 = vmul.f32 %v361, %v823
        %826 = vrot.lane.b32.xlu0 %v794, 112
        %v827 = vpop.permute.xlu0 %826
        %828 = vrot.lane.b32.xlu0 %v798, 112
        %v829 = vpop.permute.xlu0 %828
        %v830 = vsel %vm438, %v827, %v829
        %v831 = vsel %vm438, %v829, %v827
        %v834 = vcombine.low %v830, %v831
        %v836 = vunpack.c.l.s4 1966171168
        %v837 = vunpack.c.0.s8 %v836
        %v838 = vlaneseq
        %v839 = vshrl.u32 %v838, 7
        %v840 = vsub.s32 %v837, %v839
        %v841 = vrot.slane %v834, %v840
        %v843 = vunpack.c.l.s4 1966171168
        %v844 = vunpack.c.0.s8 %v843
        %v845 = vlaneseq
        %v846 = vshrl.u32 %v845, 7
        %v847 = vsub.s32 %v844, %v846
        %v848 = vrot.slane %v841, %v847
        %v850 = vmul.f32 %v363, %v848
        %s851 = sld [smem:[#allocation12 + $0x100]]
        %v852 = vstv %s851
        %v853 = vmul.f32 %v852, %v825
        %s854 = sld [smem:[#allocation12 + $0x103]]
        %v855 = vstv %s854
        %v856 = vmul.f32 %v855, %v789
        %v857 = vadd.f32 %v853, %v856
        %s858 = sld [smem:[#allocation12 + $0x106]]
        %v859 = vstv %s858
        %v860 = vmul.f32 %v859, %v850
        %v861 = vadd.f32 %v857, %v860
        %s862 = sld [smem:[#allocation12 + $0x101]]
        %v863 = vstv %s862
        %v864 = vmul.f32 %v863, %v825
        %s865 = sld [smem:[#allocation12 + $0x104]]
        %v866 = vstv %s865
        %v867 = vmul.f32 %v866, %v789
        %v868 = vadd.f32 %v864, %v867
        %s869 = sld [smem:[#allocation12 + $0x107]]
        %v870 = vstv %s869
        %v871 = vmul.f32 %v870, %v850
        %v872 = vadd.f32 %v868, %v871
        %s873 = sld [smem:[#allocation12 + $0x102]]
        %v874 = vstv %s873
        %v875 = vmul.f32 %v874, %v825
        %s876 = sld [smem:[#allocation12 + $0x105]]
        %v877 = vstv %s876
        %v878 = vmul.f32 %v877, %v789
        %v879 = vadd.f32 %v875, %v878
        %s880 = sld [smem:[#allocation12 + $0x108]]
        %v881 = vstv %s880
        %v882 = vmul.f32 %v881, %v850
        %v883 = vadd.f32 %v879, %v882
        %v885 = vlaneseq
        %v886 = vshrl.u32 %v885, 7
        %v887 = vsub.s32 0, %v886
        %v888 = vrot.slane %v861, %v887
        %v889 = vlaneseq
        %v890 = vshrl.u32 %v889, 7
        %v891 = vsub.s32 1, %v890
        %v892 = vrot.slane %v861, %v891
        %895 = vrot.lane.b32.xlu0 %v888, 1
        %v896 = vpop.permute.xlu0 %895
        %897 = vrot.lane.b32.xlu0 %v892, 1
        %v898 = vpop.permute.xlu0 %897
        %v899 = vsel %vm508, %v896, %v898
        %v900 = vsel %vm508, %v898, %v896
        %v903 = vcombine.low %v900, %v899
        %v905 = vunpack.c.l.s4 1966171168
        %v906 = vunpack.c.0.s8 %v905
        %v907 = vlaneseq
        %v908 = vshrl.u32 %v907, 7
        %v909 = vsub.s32 %v906, %v908
        %v910 = vrot.slane %v903, %v909
        %v912 = vunpack.c.l.s4 1966171168
        %v913 = vunpack.c.0.s8 %v912
        %v914 = vlaneseq
        %v915 = vshrl.u32 %v914, 7
        %v916 = vsub.s32 %v913, %v915
        %v917 = vrot.slane %v910, %v916
        %v919 = vmul.f32 %v365, %v917
        %v920 = vadd.f32 %v919, %v872
        %v922 = vlaneseq
        %v923 = vshrl.u32 %v922, 7
        %v924 = vsub.s32 0, %v923
        %v925 = vrot.slane %v883, %v924
        %v926 = vlaneseq
        %v927 = vshrl.u32 %v926, 7
        %v928 = vsub.s32 1, %v927
        %v929 = vrot.slane %v883, %v928
        %932 = vrot.lane.b32.xlu0 %v925, 127
        %v933 = vpop.permute.xlu0 %932
        %934 = vrot.lane.b32.xlu0 %v929, 127
        %v935 = vpop.permute.xlu0 %934
        %v936 = vsel %vm546, %v933, %v935
        %v937 = vsel %vm546, %v935, %v933
        %v940 = vcombine.low %v936, %v937
        %v942 = vunpack.c.l.s4 1966171168
        %v943 = vunpack.c.0.s8 %v942
        %v944 = vlaneseq
        %v945 = vshrl.u32 %v944, 7
        %v946 = vsub.s32 %v943, %v945
        %v947 = vrot.slane %v940, %v946
        %v949 = vunpack.c.l.s4 1966171168
        %v950 = vunpack.c.0.s8 %v949
        %v951 = vlaneseq
        %v952 = vshrl.u32 %v951, 7
        %v953 = vsub.s32 %v950, %v952
        %v954 = vrot.slane %v947, %v953
        %v956 = vmul.f32 %v367, %v954
        %v957 = vadd.f32 %v920, %v956
        %s958 = sld [smem:[#allocation13 + $0x2]]
        %v959 = vmax.f32 %v957, 0.0
        %v960 = vstv %s958
        %v961 = vmul.f32 %v960, %v959
        %v962 = vadd.f32 %v767, %v961
        %s963 = sld [smem:[#allocation9 + $0x180]]
        %v964 = vstv %s963
        %v965 = vmul.f32 %v964, %v369
        %s966 = sld [smem:[#allocation9 + $0x181]]
        %v967 = vstv %s966
        %v968 = vmul.f32 %v967, %v373
        %v969 = vadd.f32 %v965, %v968
        %s970 = sld [smem:[#allocation9 + $0x182]]
        %v971 = vstv %s970
        %v972 = vmul.f32 %v971, %v378
        %v973 = vadd.f32 %v969, %v972
        %s974 = sld [smem:[#allocation9 + $0x183]]
        %v975 = vstv %s974
        %v976 = vmul.f32 %v975, %v383
        %v977 = vadd.f32 %v973, %v976
        %s978 = sld [smem:[#allocation9 + $0x184]]
        %v979 = vstv %s978
        %v980 = vmul.f32 %v979, %v388
        %v981 = vadd.f32 %v977, %v980
        %s982 = sld [smem:[#allocation10 + $0x3]]
        %v983 = vstv %s982
        %v984 = vadd.f32 %v981, %v983
        %v986 = vlaneseq
        %v987 = vshrl.u32 %v986, 7
        %v988 = vsub.s32 0, %v987
        %v989 = vrot.slane %v984, %v988
        %v990 = vlaneseq
        %v991 = vshrl.u32 %v990, 7
        %v992 = vsub.s32 1, %v991
        %v993 = vrot.slane %v984, %v992
        %996 = vrot.lane.b32.xlu0 %v989, 16
        %v997 = vpop.permute.xlu0 %996
        %998 = vrot.lane.b32.xlu0 %v993, 16
        %v999 = vpop.permute.xlu0 %998
        %v1000 = vsel %vm412, %v997, %v999
        %v1001 = vsel %vm412, %v999, %v997
        %v1004 = vcombine.low %v1001, %v1000
        %v1006 = vunpack.c.l.s4 1966171168
        %v1007 = vunpack.c.0.s8 %v1006
        %v1008 = vlaneseq
        %v1009 = vshrl.u32 %v1008, 7
        %v1010 = vsub.s32 %v1007, %v1009
        %v1011 = vrot.slane %v1004, %v1010
        %v1013 = vunpack.c.l.s4 1966171168
        %v1014 = vunpack.c.0.s8 %v1013
        %v1015 = vlaneseq
        %v1016 = vshrl.u32 %v1015, 7
        %v1017 = vsub.s32 %v1014, %v1016
        %v1018 = vrot.slane %v1011, %v1017
        %v1020 = vmul.f32 %v361, %v1018
        %1021 = vrot.lane.b32.xlu0 %v989, 112
        %v1022 = vpop.permute.xlu0 %1021
        %1023 = vrot.lane.b32.xlu0 %v993, 112
        %v1024 = vpop.permute.xlu0 %1023
        %v1025 = vsel %vm438, %v1022, %v1024
        %v1026 = vsel %vm438, %v1024, %v1022
        %v1029 = vcombine.low %v1025, %v1026
        %v1031 = vunpack.c.l.s4 1966171168
        %v1032 = vunpack.c.0.s8 %v1031
        %v1033 = vlaneseq
        %v1034 = vshrl.u32 %v1033, 7
        %v1035 = vsub.s32 %v1032, %v1034
        %v1036 = vrot.slane %v1029, %v1035
        %v1038 = vunpack.c.l.s4 1966171168
        %v1039 = vunpack.c.0.s8 %v1038
        %v1040 = vlaneseq
        %v1041 = vshrl.u32 %v1040, 7
        %v1042 = vsub.s32 %v1039, %v1041
        %v1043 = vrot.slane %v1036, %v1042
        %v1045 = vmul.f32 %v363, %v1043
        %s1046 = sld [smem:[#allocation12 + $0x180]]
        %v1047 = vstv %s1046
        %v1048 = vmul.f32 %v1047, %v1020
        %s1049 = sld [smem:[#allocation12 + $0x183]]
        %v1050 = vstv %s1049
        %v1051 = vmul.f32 %v1050, %v984
        %v1052 = vadd.f32 %v1048, %v1051
        %s1053 = sld [smem:[#allocation12 + $0x186]]
        %v1054 = vstv %s1053
        %v1055 = vmul.f32 %v1054, %v1045
        %v1056 = vadd.f32 %v1052, %v1055
        %s1057 = sld [smem:[#allocation12 + $0x181]]
        %v1058 = vstv %s1057
        %v1059 = vmul.f32 %v1058, %v1020
        %s1060 = sld [smem:[#allocation12 + $0x184]]
        %v1061 = vstv %s1060
        %v1062 = vmul.f32 %v1061, %v984
        %v1063 = vadd.f32 %v1059, %v1062
        %s1064 = sld [smem:[#allocation12 + $0x187]]
        %v1065 = vstv %s1064
        %v1066 = vmul.f32 %v1065, %v1045
        %v1067 = vadd.f32 %v1063, %v1066
        %s1068 = sld [smem:[#allocation12 + $0x182]]
        %v1069 = vstv %s1068
        %v1070 = vmul.f32 %v1069, %v1020
        %s1071 = sld [smem:[#allocation12 + $0x185]]
        %v1072 = vstv %s1071
        %v1073 = vmul.f32 %v1072, %v984
        %v1074 = vadd.f32 %v1070, %v1073
        %s1075 = sld [smem:[#allocation12 + $0x188]]
        %v1076 = vstv %s1075
        %v1077 = vmul.f32 %v1076, %v1045
        %v1078 = vadd.f32 %v1074, %v1077
        %v1080 = vlaneseq
        %v1081 = vshrl.u32 %v1080, 7
        %v1082 = vsub.s32 0, %v1081
        %v1083 = vrot.slane %v1056, %v1082
        %v1084 = vlaneseq
        %v1085 = vshrl.u32 %v1084, 7
        %v1086 = vsub.s32 1, %v1085
        %v1087 = vrot.slane %v1056, %v1086
        %1090 = vrot.lane.b32.xlu0 %v1083, 1
        %v1091 = vpop.permute.xlu0 %1090
        %1092 = vrot.lane.b32.xlu0 %v1087, 1
        %v1093 = vpop.permute.xlu0 %1092
        %v1094 = vsel %vm508, %v1091, %v1093
        %v1095 = vsel %vm508, %v1093, %v1091
        %v1098 = vcombine.low %v1095, %v1094
        %v1100 = vunpack.c.l.s4 1966171168
        %v1101 = vunpack.c.0.s8 %v1100
        %v1102 = vlaneseq
        %v1103 = vshrl.u32 %v1102, 7
        %v1104 = vsub.s32 %v1101, %v1103
        %v1105 = vrot.slane %v1098, %v1104
        %v1107 = vunpack.c.l.s4 1966171168
        %v1108 = vunpack.c.0.s8 %v1107
        %v1109 = vlaneseq
        %v1110 = vshrl.u32 %v1109, 7
        %v1111 = vsub.s32 %v1108, %v1110
        %v1112 = vrot.slane %v1105, %v1111
        %v1114 = vmul.f32 %v365, %v1112
        %v1115 = vadd.f32 %v1114, %v1067
        %v1117 = vlaneseq
        %v1118 = vshrl.u32 %v1117, 7
        %v1119 = vsub.s32 0, %v1118
        %v1120 = vrot.slane %v1078, %v1119
        %v1121 = vlaneseq
        %v1122 = vshrl.u32 %v1121, 7
        %v1123 = vsub.s32 1, %v1122
        %v1124 = vrot.slane %v1078, %v1123
        %1127 = vrot.lane.b32.xlu0 %v1120, 127
        %v1128 = vpop.permute.xlu0 %1127
        %1129 = vrot.lane.b32.xlu0 %v1124, 127
        %v1130 = vpop.permute.xlu0 %1129
        %v1131 = vsel %vm546, %v1128, %v1130
        %v1132 = vsel %vm546, %v1130, %v1128
        %v1135 = vcombine.low %v1131, %v1132
        %v1137 = vunpack.c.l.s4 1966171168
        %v1138 = vunpack.c.0.s8 %v1137
        %v1139 = vlaneseq
        %v1140 = vshrl.u32 %v1139, 7
        %v1141 = vsub.s32 %v1138, %v1140
        %v1142 = vrot.slane %v1135, %v1141
        %v1144 = vunpack.c.l.s4 1966171168
        %v1145 = vunpack.c.0.s8 %v1144
        %v1146 = vlaneseq
        %v1147 = vshrl.u32 %v1146, 7
        %v1148 = vsub.s32 %v1145, %v1147
        %v1149 = vrot.slane %v1142, %v1148
        %v1151 = vmul.f32 %v367, %v1149
        %v1152 = vadd.f32 %v1115, %v1151
        %s1153 = sld [smem:[#allocation13 + $0x3]]
        %v1154 = vmax.f32 %v1152, 0.0
        %v1155 = vstv %s1153
        %v1156 = vmul.f32 %v1155, %v1154
        %v1157 = vadd.f32 %v962, %v1156
        %s1158 = sld [smem:[#allocation9 + $0x200]]
        %v1159 = vstv %s1158
        %v1160 = vmul.f32 %v1159, %v369
        %s1161 = sld [smem:[#allocation9 + $0x201]]
        %v1162 = vstv %s1161
        %v1163 = vmul.f32 %v1162, %v373
        %v1164 = vadd.f32 %v1160, %v1163
        %s1165 = sld [smem:[#allocation9 + $0x202]]
        %v1166 = vstv %s1165
        %v1167 = vmul.f32 %v1166, %v378
        %v1168 = vadd.f32 %v1164, %v1167
        %s1169 = sld [smem:[#allocation9 + $0x203]]
        %v1170 = vstv %s1169
        %v1171 = vmul.f32 %v1170, %v383
        %v1172 = vadd.f32 %v1168, %v1171
        %s1173 = sld [smem:[#allocation9 + $0x204]]
        %v1174 = vstv %s1173
        %v1175 = vmul.f32 %v1174, %v388
        %v1176 = vadd.f32 %v1172, %v1175
        %s1177 = sld [smem:[#allocation10 + $0x4]]
        %v1178 = vstv %s1177
        %v1179 = vadd.f32 %v1176, %v1178
        %v1181 = vlaneseq
        %v1182 = vshrl.u32 %v1181, 7
        %v1183 = vsub.s32 0, %v1182
        %v1184 = vrot.slane %v1179, %v1183
        %v1185 = vlaneseq
        %v1186 = vshrl.u32 %v1185, 7
        %v1187 = vsub.s32 1, %v1186
        %v1188 = vrot.slane %v1179, %v1187
        %1191 = vrot.lane.b32.xlu0 %v1184, 16
        %v1192 = vpop.permute.xlu0 %1191
        %1193 = vrot.lane.b32.xlu0 %v1188, 16
        %v1194 = vpop.permute.xlu0 %1193
        %v1195 = vsel %vm412, %v1192, %v1194
        %v1196 = vsel %vm412, %v1194, %v1192
        %v1199 = vcombine.low %v1196, %v1195
        %v1201 = vunpack.c.l.s4 1966171168
        %v1202 = vunpack.c.0.s8 %v1201
        %v1203 = vlaneseq
        %v1204 = vshrl.u32 %v1203, 7
        %v1205 = vsub.s32 %v1202, %v1204
        %v1206 = vrot.slane %v1199, %v1205
        %v1208 = vunpack.c.l.s4 1966171168
        %v1209 = vunpack.c.0.s8 %v1208
        %v1210 = vlaneseq
        %v1211 = vshrl.u32 %v1210, 7
        %v1212 = vsub.s32 %v1209, %v1211
        %v1213 = vrot.slane %v1206, %v1212
        %v1215 = vmul.f32 %v361, %v1213
        %1216 = vrot.lane.b32.xlu0 %v1184, 112
        %v1217 = vpop.permute.xlu0 %1216
        %1218 = vrot.lane.b32.xlu0 %v1188, 112
        %v1219 = vpop.permute.xlu0 %1218
        %v1220 = vsel %vm438, %v1217, %v1219
        %v1221 = vsel %vm438, %v1219, %v1217
        %v1224 = vcombine.low %v1220, %v1221
        %v1226 = vunpack.c.l.s4 1966171168
        %v1227 = vunpack.c.0.s8 %v1226
        %v1228 = vlaneseq
        %v1229 = vshrl.u32 %v1228, 7
        %v1230 = vsub.s32 %v1227, %v1229
        %v1231 = vrot.slane %v1224, %v1230
        %v1233 = vunpack.c.l.s4 1966171168
        %v1234 = vunpack.c.0.s8 %v1233
        %v1235 = vlaneseq
        %v1236 = vshrl.u32 %v1235, 7
        %v1237 = vsub.s32 %v1234, %v1236
        %v1238 = vrot.slane %v1231, %v1237
        %v1240 = vmul.f32 %v363, %v1238
        %s1241 = sld [smem:[#allocation12 + $0x200]]
        %v1242 = vstv %s1241
        %v1243 = vmul.f32 %v1242, %v1215
        %s1244 = sld [smem:[#allocation12 + $0x203]]
        %v1245 = vstv %s1244
        %v1246 = vmul.f32 %v1245, %v1179
        %v1247 = vadd.f32 %v1243, %v1246
        %s1248 = sld [smem:[#allocation12 + $0x206]]
        %v1249 = vstv %s1248
        %v1250 = vmul.f32 %v1249, %v1240
        %v1251 = vadd.f32 %v1247, %v1250
        %s1252 = sld [smem:[#allocation12 + $0x201]]
        %v1253 = vstv %s1252
        %v1254 = vmul.f32 %v1253, %v1215
        %s1255 = sld [smem:[#allocation12 + $0x204]]
        %v1256 = vstv %s1255
        %v1257 = vmul.f32 %v1256, %v1179
        %v1258 = vadd.f32 %v1254, %v1257
        %s1259 = sld [smem:[#allocation12 + $0x207]]
        %v1260 = vstv %s1259
        %v1261 = vmul.f32 %v1260, %v1240
        %v1262 = vadd.f32 %v1258, %v1261
        %s1263 = sld [smem:[#allocation12 + $0x202]]
        %v1264 = vstv %s1263
        %v1265 = vmul.f32 %v1264, %v1215
        %s1266 = sld [smem:[#allocation12 + $0x205]]
        %v1267 = vstv %s1266
        %v1268 = vmul.f32 %v1267, %v1179
        %v1269 = vadd.f32 %v1265, %v1268
        %s1270 = sld [smem:[#allocation12 + $0x208]]
        %v1271 = vstv %s1270
        %v1272 = vmul.f32 %v1271, %v1240
        %v1273 = vadd.f32 %v1269, %v1272
        %v1275 = vlaneseq
        %v1276 = vshrl.u32 %v1275, 7
        %v1277 = vsub.s32 0, %v1276
        %v1278 = vrot.slane %v1251, %v1277
        %v1279 = vlaneseq
        %v1280 = vshrl.u32 %v1279, 7
        %v1281 = vsub.s32 1, %v1280
        %v1282 = vrot.slane %v1251, %v1281
        %1285 = vrot.lane.b32.xlu0 %v1278, 1
        %v1286 = vpop.permute.xlu0 %1285
        %1287 = vrot.lane.b32.xlu0 %v1282, 1
        %v1288 = vpop.permute.xlu0 %1287
        %v1289 = vsel %vm508, %v1286, %v1288
        %v1290 = vsel %vm508, %v1288, %v1286
        %v1293 = vcombine.low %v1290, %v1289
        %v1295 = vunpack.c.l.s4 1966171168
        %v1296 = vunpack.c.0.s8 %v1295
        %v1297 = vlaneseq
        %v1298 = vshrl.u32 %v1297, 7
        %v1299 = vsub.s32 %v1296, %v1298
        %v1300 = vrot.slane %v1293, %v1299
        %v1302 = vunpack.c.l.s4 1966171168
        %v1303 = vunpack.c.0.s8 %v1302
        %v1304 = vlaneseq
        %v1305 = vshrl.u32 %v1304, 7
        %v1306 = vsub.s32 %v1303, %v1305
        %v1307 = vrot.slane %v1300, %v1306
        %v1309 = vmul.f32 %v365, %v1307
        %v1310 = vadd.f32 %v1309, %v1262
        %v1312 = vlaneseq
        %v1313 = vshrl.u32 %v1312, 7
        %v1314 = vsub.s32 0, %v1313
        %v1315 = vrot.slane %v1273, %v1314
        %v1316 = vlaneseq
        %v1317 = vshrl.u32 %v1316, 7
        %v1318 = vsub.s32 1, %v1317
        %v1319 = vrot.slane %v1273, %v1318
        %1322 = vrot.lane.b32.xlu0 %v1315, 127
        %v1323 = vpop.permute.xlu0 %1322
        %1324 = vrot.lane.b32.xlu0 %v1319, 127
        %v1325 = vpop.permute.xlu0 %1324
        %v1326 = vsel %vm546, %v1323, %v1325
        %v1327 = vsel %vm546, %v1325, %v1323
        %v1330 = vcombine.low %v1326, %v1327
        %v1332 = vunpack.c.l.s4 1966171168
        %v1333 = vunpack.c.0.s8 %v1332
        %v1334 = vlaneseq
        %v1335 = vshrl.u32 %v1334, 7
        %v1336 = vsub.s32 %v1333, %v1335
        %v1337 = vrot.slane %v1330, %v1336
        %v1339 = vunpack.c.l.s4 1966171168
        %v1340 = vunpack.c.0.s8 %v1339
        %v1341 = vlaneseq
        %v1342 = vshrl.u32 %v1341, 7
        %v1343 = vsub.s32 %v1340, %v1342
        %v1344 = vrot.slane %v1337, %v1343
        %v1346 = vmul.f32 %v367, %v1344
        %v1347 = vadd.f32 %v1310, %v1346
        %s1348 = sld [smem:[#allocation13 + $0x4]]
        %v1349 = vmax.f32 %v1347, 0.0
        %v1350 = vstv %s1348
        %v1351 = vmul.f32 %v1350, %v1349
        %v1352 = vadd.f32 %v1157, %v1351
        %s1353 = sld [smem:[#allocation2]]
        %v1354 = vstv %s1353
        %v1355 = vadd.f32 %v1352, %v1354
        %v1356 = vlaneseq
        %vm1357 = vcmp.ge.s32.totalorder %v1356, 0
        %vm1358 = vcmp.lt.s32.totalorder %v1356, 256
        %vm1359 = vmand %vm1357, %vm1358
        %1360 = vst.msk [vmem:[%s360] sm:$0x3] %vm1359, %v1355
        %s1361 = sand.u32 %s189, 1
        %s1362 = scalar_lea.sflag [#allocation5], %s1361
        %s1363 = sand.u32 %s189, 1
        %s1364 = smul.addr %s1363, 2
        %s1365 = scalar_lea.vmem [#allocation15], %s1364
        // Predicated region
        $region73: #{tpu_custom_call.1} parent=47 // pred_check
          %p1366 = pneg %p199
        $region74: #{tpu_custom_call.1} parent=47 // pred_check_branch
          %1368 = sbr.rel (%p1366) target = $region76
        $region75: #{tpu_custom_call.1} parent=47 // pred_region
          %s1370 = ssub.s32 32, 32
          %1371 = vsyncadd %s1362, %s1370
          %s1372 = smul.addr %s29, 2
          %s1373 = smul.addr %s1372, 16
          %s1374 = scalar_lea.hbm %s7, %s1373
          %s1376 = sshll.u32 %s1365, 4
          %s1377 = int_to_ptr.vmem [resolvable:$true] %s1376
          %1379 = dma.vmem_to_hbm [thread:$0]  %s1377, 32, %s1374, %s1362
        $region76: #{tpu_custom_call.1} parent=47 // pred_fallthru
          _
      $region48: #{tpu_custom_call.1} parent=5 // pred_fallthru
        _
      %p1380 = scmp.le.s32.totalorder 2, %s24
      // Predicated region
      $region77: #{tpu_custom_call.1} parent=5 // pred_check
        %p1381 = pneg %p1380
      $region78: #{tpu_custom_call.1} parent=5 // pred_check_branch
        %1383 = sbr.rel (%p1381) target = $region80
      $region79: #{tpu_custom_call.1} parent=5 // pred_region
        %s1384 = ssub.s32 %s24, 2
        // Predicated region
        $region81: #{tpu_custom_call.1} parent=79 // pred_check
          %p1385 = pneg %p205
        $region82: #{tpu_custom_call.1} parent=79 // pred_check_branch
          %1387 = sbr.rel (%p1385) target = $region84
        $region83: #{tpu_custom_call.1} parent=79 // pred_region
          %s1388 = sand.u32 %s190, 1
          %s1389 = scalar_lea.sflag [#allocation5], %s1388
          %s1390 = sand.u32 %s190, 1
          %s1391 = smul.addr %s1390, 2
          %s1392 = scalar_lea.vmem [#allocation15], %s1391
          %1393 = dma.done %s1389, 32
        $region84: #{tpu_custom_call.1} parent=79 // pred_fallthru
          _
      $region80: #{tpu_custom_call.1} parent=5 // pred_fallthru
        _
    $region6: #{tpu_custom_call.1} parent=1 // loop_footer
      %s28 = sadd.s32 1, %s24
    $region7: #{tpu_custom_call.1} parent=1 // loop_footer_branch
      %23 = sbr.rel target = $region3
    $region8: #{tpu_custom_call.1} parent=1 // loop_exit
      _
    %1394 = vsyncpa [#allocation4], 1
    %s1395 = scalar_lea.sflag [#allocation4], 1
    %1396 = vsyncpa %s1395, 1
    %1397 = vsyncpa [#allocation8], 1
    %1398 = vsyncpa [#allocation5], 1
    %s1399 = scalar_lea.sflag [#allocation5], 1
    %1400 = vsyncpa %s1399, 1
    %1401 = vsyncpa [#allocation6], 1
    %s1402 = scalar_lea.sflag [#allocation6], 1
    %1403 = vsyncpa %s1402, 1
    %1404 = vsyncpa [#allocation11], 1
    %1405 = vsyncpa [#allocation14], 1

</llo_original>
